<compile_context>
chip_gen: v6e
topology: v6e:2x2x1
jax: 0.10.0
libtpu: 0.0.40
codegen_flags: <defaults>
</compile_context>

<pallas_src>
import jax
import jax.numpy as jnp
from jax import lax
from jax.experimental import pallas as pl
from jax.experimental.pallas import tpu as pltpu


# ----------------------------- fused Pallas kernel -----------------------------

def _make_fused_kernel(num_layers, T, Bp, H):
    H2 = 2 * H

    def kernel(*refs):
        # ---- unpack refs: x | (w_ih_cat, w_hh_cat, b_cat) * L | w_fc | b_fc | out ----
        x_ref = refs[0]                                        # (T*Bp, Din) time-major
        layer_refs = [refs[1 + 3 * l: 1 + 3 * (l + 1)] for l in range(num_layers)]
        w_fc_ref = refs[1 + 3 * num_layers]                    # (2H, C)
        b_fc_ref = refs[2 + 3 * num_layers]                    # (1, C)
        out_ref = refs[3 + 3 * num_layers]                     # (Bp, C)

        x_in = x_ref[...]                                      # (T*Bp, Din_l) value

        h_last = None
        for l, (w_ih_ref, w_hh_ref, b_ref) in enumerate(layer_refs):
            w_hh = w_hh_ref[...]                               # (2H, 8H) block-diag, gate-grouped

            # Hoisted input projection for BOTH directions: one matmul per layer.
            # Column layout: [i_f, i_b, f_f, f_b, g_f, g_b, o_f, o_b] (each H wide).
            gin = jnp.dot(x_in, w_ih_ref[...],
                          preferred_element_type=jnp.float32) + b_ref[...]

            # Static per-timestep row blocks (Bp is a multiple of 8 -> aligned slices).
            gin_t = [gin[t * Bp:(t + 1) * Bp, :] for t in range(T)]

            # Step-j schedule: fw gate groups from time j, bw gate groups from time
            # T-1-j.  Built once per layer, OFF the recurrence critical chain.
            gin_sched = []
            for j in range(T):
                gf, gb = gin_t[j], gin_t[T - 1 - j]
                parts = []
                for g in range(4):
                    parts.append(gf[:, (2 * g) * H:(2 * g + 1) * H])       # fw gate g (time j)
                    parts.append(gb[:, (2 * g + 1) * H:(2 * g + 2) * H])   # bw gate g (time T-1-j)
                gin_sched.append(jnp.concatenate(parts, axis=-1))          # (Bp, 8H)

            # Merged fw/bw recurrence: one matmul + one sigmoid + one tanh per step.
            # State layout: h_cat/c_cat = [fw (H) | bw (H)].
            hs = []
            h_cat = None
            c_cat = None
            for j in range(T):
                if h_cat is None:      # zero initial state -> skip dead h@W_hh
                    gates = gin_sched[j]
                else:
                    gates = gin_sched[j] + jnp.dot(h_cat, w_hh,
                                                   preferred_element_type=jnp.float32)
                sig = jax.nn.sigmoid(gates)    # full-width (Bp, 8H) EUP pass
                tnh = jnp.tanh(gates)          # full-width (Bp, 8H) EUP pass
                i_g = sig[:, 0 * H2:1 * H2]    # [i_f | i_b]
                f_g = sig[:, 1 * H2:2 * H2]    # [f_f | f_b]
                g_g = tnh[:, 2 * H2:3 * H2]    # [g_f | g_b]
                o_g = sig[:, 3 * H2:4 * H2]    # [o_f | o_b]
                c_cat = i_g * g_g if c_cat is None else f_g * c_cat + i_g * g_g
                h_cat = o_g * jnp.tanh(c_cat)
                hs.append(h_cat)               # hs[j] = [h_f(time j) | h_b(time T-1-j)]

            if l != num_layers - 1:
                # Next layer input sequence (value-resident, one batched assembly):
                # seq[t] = [h_f(t) | h_b(t)] = [hs[t][:, :H] | hs[T-1-t][:, H:]]
                seq_rows = [jnp.concatenate([hs[t][:, 0:H], hs[T - 1 - t][:, H:H2]], axis=-1)
                            for t in range(T)]
                x_in = jnp.concatenate(seq_rows, axis=0)       # (T*Bp, 2H), aligned pieces
            else:
                # h[:, -1, :] = [h_f(T-1) | h_b(T-1)]; bw output at time T-1 is hs[0]'s bw half.
                h_last = jnp.concatenate([hs[T - 1][:, 0:H], hs[0][:, H:H2]], axis=-1)

        # FC head: single (Bp, 2H) @ (2H, C) matmul.
        out_ref[...] = (jnp.dot(h_last, w_fc_ref[...],
                                preferred_element_type=jnp.float32) + b_fc_ref[...])

    return kernel


# --------------------- wrapper-side parameter preparation ----------------------

def _gate_group(a_fw, a_bw, H):
    """Interleave per-direction gate blocks: [i_f,i_b,f_f,f_b,g_f,g_b,o_f,o_b]."""
    parts = []
    for g in range(4):
        parts.append(a_fw[..., g * H:(g + 1) * H])
        parts.append(a_bw[..., g * H:(g + 1) * H])
    return jnp.concatenate(parts, axis=-1)


def _prep_layer(layer, H):
    """Build kernel-layout weights: W_ih_cat (Din,8H), W_hh_cat (2H,8H) block-diag, b_cat (1,8H)."""
    w_ih_cat = _gate_group(layer["w_ih_fw"], layer["w_ih_bw"], H)
    b_cat = _gate_group(layer["b_fw"], layer["b_bw"], H)
    w_hh_cat = jnp.zeros((2 * H, 8 * H), jnp.float32)
    for g in range(4):
        w_hh_cat = w_hh_cat.at[0:H, (2 * g) * H:(2 * g + 1) * H].set(
            layer["w_hh_fw"][:, g * H:(g + 1) * H])
        w_hh_cat = w_hh_cat.at[H:2 * H, (2 * g + 1) * H:(2 * g + 2) * H].set(
            layer["w_hh_bw"][:, g * H:(g + 1) * H])
    return [w_ih_cat, w_hh_cat, b_cat]


def eeg_lstm_forward(x, params):
    """x: (B, T, input_size) -> logits (B, num_classes).

    EVAL semantics: nn.LSTM's inter-layer dropout(p=0.5) is train-only and omitted.
    """
    B, T, Din = x.shape
    layers = params["lstm"]
    w_fc, b_fc = params["fc"]
    num_layers = len(layers)
    H = layers[0]["w_hh_fw"].shape[0]
    C = w_fc.shape[1]

    # Pad batch rows to a multiple of 8 sublanes so every per-timestep block is aligned.
    Bp = ((B + 7) // 8) * 8
    x_pad = jnp.zeros((Bp, T, Din), jnp.float32).at[:B].set(x.astype(jnp.float32))
    # time-major + flatten so the hoisted projection is one (T*Bp, Din) matmul
    x_flat = jnp.transpose(x_pad, (1, 0, 2)).reshape(T * Bp, Din)

    flat_inputs = [x_flat]
    for layer in layers:
        flat_inputs.extend(_prep_layer(layer, H))
    flat_inputs.extend([w_fc, b_fc])

    vmem = pl.BlockSpec(memory_space=pltpu.MemorySpace.VMEM)
    out = pl.pallas_call(
        _make_fused_kernel(num_layers, T, Bp, H),
        out_shape=jax.ShapeDtypeStruct((Bp, C), jnp.float32),
        in_specs=[vmem] * len(flat_inputs),
        out_specs=vmem,
    )(*flat_inputs)
    return out[:B]


# ------------------------ deterministic parameters --------------------------

def init_params(key, input_size, hidden_size, num_layers, num_classes):
    """Per layer (torch-like, per direction): w_ih (Din,4H), w_hh (H,4H), b (1,4H)=(b_ih+b_hh)."""
    H = hidden_size
    k = 1.0 / jnp.sqrt(jnp.float32(H))

    def uni(key, shape):
        return jax.random.uniform(key, shape, jnp.float32, -k, k)

    layers = []
    for layer_idx in range(num_layers):
        d_in = input_size if layer_idx == 0 else 2 * H
        key, k1, k2, k3, k4, k5, k6, k7, k8 = jax.random.split(key, 9)
        layers.append(dict(
            w_ih_fw=uni(k1, (d_in, 4 * H)),
            w_hh_fw=uni(k2, (H, 4 * H)),
            b_fw=uni(k3, (1, 4 * H)) + uni(k4, (1, 4 * H)),
            w_ih_bw=uni(k5, (d_in, 4 * H)),
            w_hh_bw=uni(k6, (H, 4 * H)),
            b_bw=uni(k7, (1, 4 * H)) + uni(k8, (1, 4 * H)),
        ))

    key, k1, k2 = jax.random.split(key, 3)
    kf = 1.0 / jnp.sqrt(jnp.float32(2 * H))
    w_fc = jax.random.uniform(k1, (2 * H, num_classes), jnp.float32, -kf, kf)
    b_fc = jax.random.uniform(k2, (1, num_classes), jnp.float32, -kf, kf)
    return {"lstm": layers, "fc": (w_fc, b_fc)}


# --------------------------- pure-JAX reference ------------------------------

def _lstm_layer_ref(x_tbd, w_ih, w_hh, b):
    T, B, _ = x_tbd.shape
    H = w_hh.shape[0]

    def step(carry, x_t):
        h, c = carry
        gates = x_t @ w_ih + h @ w_hh + b
        i = jax.nn.sigmoid(gates[:, :H])
        f = jax.nn.sigmoid(gates[:, H:2 * H])
        g = jnp.tanh(gates[:, 2 * H:3 * H])
        o = jax.nn.sigmoid(gates[:, 3 * H:])
        c = f * c + i * g
        h = o * jnp.tanh(c)
        return (h, c), h

    init = (jnp.zeros((B, H), jnp.float32), jnp.zeros((B, H), jnp.float32))
    _, hs = lax.scan(step, init, x_tbd)
    return hs


def eeg_lstm_forward_ref(x, params):
    h = jnp.transpose(x, (1, 0, 2))
    for layer in params["lstm"]:
        fw = _lstm_layer_ref(h, layer["w_ih_fw"], layer["w_hh_fw"], layer["b_fw"])
        bw = _lstm_layer_ref(h[::-1], layer["w_ih_bw"], layer["w_hh_bw"], layer["b_bw"])[::-1]
        h = jnp.concatenate([fw, bw], axis=-1)
    w_fc, b_fc = params["fc"]
    return h[-1] @ w_fc + b_fc


# --------------------------------- main --------------------------------------

if __name__ == "__main__":
    # Small shapes consistent with EEG_LSTM(input_size, hidden_size, 2, num_classes)
    B, T = 2, 8
    input_size, hidden_size, num_layers, num_classes = 16, 32, 2, 10

    key = jax.random.PRNGKey(0)
    kx, kp = jax.random.split(key)
    x = jax.random.normal(kx, (B, T, input_size), jnp.float32)
    params = init_params(kp, input_size, hidden_size, num_layers, num_classes)

    out = jax.block_until_ready(eeg_lstm_forward(x, params))
    ref = jax.block_until_ready(eeg_lstm_forward_ref(x, params))

    assert out.shape == (B, num_classes)
    assert jnp.allclose(out, ref, atol=1e-4, rtol=1e-4), "mismatch vs pure-JAX reference"
    print("KERNEL_OK")
</pallas_src>

<mosaic_0001>
module attributes {stable_mosaic.version = 11 : i64} {
  func.func @kernel(%arg0: memref<64x16xf32, #tpu.memory_space<vmem>>, %arg1: memref<16x256xf32, #tpu.memory_space<vmem>>, %arg2: memref<64x256xf32, #tpu.memory_space<vmem>>, %arg3: memref<1x256xf32, #tpu.memory_space<vmem>>, %arg4: memref<64x256xf32, #tpu.memory_space<vmem>>, %arg5: memref<64x256xf32, #tpu.memory_space<vmem>>, %arg6: memref<1x256xf32, #tpu.memory_space<vmem>>, %arg7: memref<64x10xf32, #tpu.memory_space<vmem>>, %arg8: memref<1x10xf32, #tpu.memory_space<vmem>>, %arg9: memref<8x10xf32, #tpu.memory_space<vmem>>) attributes {dimension_semantics = [], scalar_prefetch = 0 : i64, scratch_operands = 0 : i64, tpu.core_type = #tpu.core_type<tc>} {
    %c0 = arith.constant 0 : index
    %c0_0 = arith.constant 0 : index
    %0 = vector.load %arg0[%c0, %c0_0] : memref<64x16xf32, #tpu.memory_space<vmem>>, vector<64x16xf32>
    %c0_1 = arith.constant 0 : index
    %c0_2 = arith.constant 0 : index
    %1 = vector.load %arg2[%c0_1, %c0_2] : memref<64x256xf32, #tpu.memory_space<vmem>>, vector<64x256xf32>
    %c0_3 = arith.constant 0 : index
    %c0_4 = arith.constant 0 : index
    %2 = vector.load %arg1[%c0_3, %c0_4] : memref<16x256xf32, #tpu.memory_space<vmem>>, vector<16x256xf32>
    %cst = arith.constant dense<0.000000e+00> : vector<64x256xf32>
    %3 = tpu.matmul %0, %2, %cst {dimension_numbers = #tpu.dot_dimension_numbers<[1], [0], [0], [1], [0, 0, 1, 1], [], []>} : vector<64x16xf32>, vector<16x256xf32>, vector<64x256xf32> -> vector<64x256xf32>
    %c0_5 = arith.constant 0 : index
    %c0_6 = arith.constant 0 : index
    %4 = vector.load %arg3[%c0_5, %c0_6] : memref<1x256xf32, #tpu.memory_space<vmem>>, vector<1x256xf32>
    %5 = vector.broadcast %4 : vector<1x256xf32> to vector<64x256xf32>
    %6 = arith.addf %3, %5 : vector<64x256xf32>
    %7 = vector.extract_strided_slice %6 {offsets = [0, 0], sizes = [8, 256], strides = [1, 1]} : vector<64x256xf32> to vector<8x256xf32>
    %8 = vector.extract_strided_slice %6 {offsets = [8, 0], sizes = [8, 256], strides = [1, 1]} : vector<64x256xf32> to vector<8x256xf32>
    %9 = vector.extract_strided_slice %6 {offsets = [16, 0], sizes = [8, 256], strides = [1, 1]} : vector<64x256xf32> to vector<8x256xf32>
    %10 = vector.extract_strided_slice %6 {offsets = [24, 0], sizes = [8, 256], strides = [1, 1]} : vector<64x256xf32> to vector<8x256xf32>
    %11 = vector.extract_strided_slice %6 {offsets = [32, 0], sizes = [8, 256], strides = [1, 1]} : vector<64x256xf32> to vector<8x256xf32>
    %12 = vector.extract_strided_slice %6 {offsets = [40, 0], sizes = [8, 256], strides = [1, 1]} : vector<64x256xf32> to vector<8x256xf32>
    %13 = vector.extract_strided_slice %6 {offsets = [48, 0], sizes = [8, 256], strides = [1, 1]} : vector<64x256xf32> to vector<8x256xf32>
    %14 = vector.extract_strided_slice %6 {offsets = [56, 0], sizes = [8, 256], strides = [1, 1]} : vector<64x256xf32> to vector<8x256xf32>
    %15 = vector.extract_strided_slice %7 {offsets = [0, 0], sizes = [8, 32], strides = [1, 1]} : vector<8x256xf32> to vector<8x32xf32>
    %16 = vector.extract_strided_slice %14 {offsets = [0, 32], sizes = [8, 32], strides = [1, 1]} : vector<8x256xf32> to vector<8x32xf32>
    %17 = vector.extract_strided_slice %7 {offsets = [0, 64], sizes = [8, 32], strides = [1, 1]} : vector<8x256xf32> to vector<8x32xf32>
    %18 = vector.extract_strided_slice %14 {offsets = [0, 96], sizes = [8, 32], strides = [1, 1]} : vector<8x256xf32> to vector<8x32xf32>
    %19 = vector.extract_strided_slice %7 {offsets = [0, 128], sizes = [8, 32], strides = [1, 1]} : vector<8x256xf32> to vector<8x32xf32>
    %20 = vector.extract_strided_slice %14 {offsets = [0, 160], sizes = [8, 32], strides = [1, 1]} : vector<8x256xf32> to vector<8x32xf32>
    %21 = vector.extract_strided_slice %7 {offsets = [0, 192], sizes = [8, 32], strides = [1, 1]} : vector<8x256xf32> to vector<8x32xf32>
    %22 = vector.extract_strided_slice %14 {offsets = [0, 224], sizes = [8, 32], strides = [1, 1]} : vector<8x256xf32> to vector<8x32xf32>
    %23 = tpu.concatenate %15, %16, %17, %18, %19, %20, %21, %22 in 1 : vector<8x32xf32>, vector<8x32xf32>, vector<8x32xf32>, vector<8x32xf32>, vector<8x32xf32>, vector<8x32xf32>, vector<8x32xf32>, vector<8x32xf32> -> vector<8x256xf32>
    %24 = vector.extract_strided_slice %8 {offsets = [0, 0], sizes = [8, 32], strides = [1, 1]} : vector<8x256xf32> to vector<8x32xf32>
    %25 = vector.extract_strided_slice %13 {offsets = [0, 32], sizes = [8, 32], strides = [1, 1]} : vector<8x256xf32> to vector<8x32xf32>
    %26 = vector.extract_strided_slice %8 {offsets = [0, 64], sizes = [8, 32], strides = [1, 1]} : vector<8x256xf32> to vector<8x32xf32>
    %27 = vector.extract_strided_slice %13 {offsets = [0, 96], sizes = [8, 32], strides = [1, 1]} : vector<8x256xf32> to vector<8x32xf32>
    %28 = vector.extract_strided_slice %8 {offsets = [0, 128], sizes = [8, 32], strides = [1, 1]} : vector<8x256xf32> to vector<8x32xf32>
    %29 = vector.extract_strided_slice %13 {offsets = [0, 160], sizes = [8, 32], strides = [1, 1]} : vector<8x256xf32> to vector<8x32xf32>
    %30 = vector.extract_strided_slice %8 {offsets = [0, 192], sizes = [8, 32], strides = [1, 1]} : vector<8x256xf32> to vector<8x32xf32>
    %31 = vector.extract_strided_slice %13 {offsets = [0, 224], sizes = [8, 32], strides = [1, 1]} : vector<8x256xf32> to vector<8x32xf32>
    %32 = tpu.concatenate %24, %25, %26, %27, %28, %29, %30, %31 in 1 : vector<8x32xf32>, vector<8x32xf32>, vector<8x32xf32>, vector<8x32xf32>, vector<8x32xf32>, vector<8x32xf32>, vector<8x32xf32>, vector<8x32xf32> -> vector<8x256xf32>
    %33 = vector.extract_strided_slice %9 {offsets = [0, 0], sizes = [8, 32], strides = [1, 1]} : vector<8x256xf32> to vector<8x32xf32>
    %34 = vector.extract_strided_slice %12 {offsets = [0, 32], sizes = [8, 32], strides = [1, 1]} : vector<8x256xf32> to vector<8x32xf32>
    %35 = vector.extract_strided_slice %9 {offsets = [0, 64], sizes = [8, 32], strides = [1, 1]} : vector<8x256xf32> to vector<8x32xf32>
    %36 = vector.extract_strided_slice %12 {offsets = [0, 96], sizes = [8, 32], strides = [1, 1]} : vector<8x256xf32> to vector<8x32xf32>
    %37 = vector.extract_strided_slice %9 {offsets = [0, 128], sizes = [8, 32], strides = [1, 1]} : vector<8x256xf32> to vector<8x32xf32>
    %38 = vector.extract_strided_slice %12 {offsets = [0, 160], sizes = [8, 32], strides = [1, 1]} : vector<8x256xf32> to vector<8x32xf32>
    %39 = vector.extract_strided_slice %9 {offsets = [0, 192], sizes = [8, 32], strides = [1, 1]} : vector<8x256xf32> to vector<8x32xf32>
    %40 = vector.extract_strided_slice %12 {offsets = [0, 224], sizes = [8, 32], strides = [1, 1]} : vector<8x256xf32> to vector<8x32xf32>
    %41 = tpu.concatenate %33, %34, %35, %36, %37, %38, %39, %40 in 1 : vector<8x32xf32>, vector<8x32xf32>, vector<8x32xf32>, vector<8x32xf32>, vector<8x32xf32>, vector<8x32xf32>, vector<8x32xf32>, vector<8x32xf32> -> vector<8x256xf32>
    %42 = vector.extract_strided_slice %10 {offsets = [0, 0], sizes = [8, 32], strides = [1, 1]} : vector<8x256xf32> to vector<8x32xf32>
    %43 = vector.extract_strided_slice %11 {offsets = [0, 32], sizes = [8, 32], strides = [1, 1]} : vector<8x256xf32> to vector<8x32xf32>
    %44 = vector.extract_strided_slice %10 {offsets = [0, 64], sizes = [8, 32], strides = [1, 1]} : vector<8x256xf32> to vector<8x32xf32>
    %45 = vector.extract_strided_slice %11 {offsets = [0, 96], sizes = [8, 32], strides = [1, 1]} : vector<8x256xf32> to vector<8x32xf32>
    %46 = vector.extract_strided_slice %10 {offsets = [0, 128], sizes = [8, 32], strides = [1, 1]} : vector<8x256xf32> to vector<8x32xf32>
    %47 = vector.extract_strided_slice %11 {offsets = [0, 160], sizes = [8, 32], strides = [1, 1]} : vector<8x256xf32> to vector<8x32xf32>
    %48 = vector.extract_strided_slice %10 {offsets = [0, 192], sizes = [8, 32], strides = [1, 1]} : vector<8x256xf32> to vector<8x32xf32>
    %49 = vector.extract_strided_slice %11 {offsets = [0, 224], sizes = [8, 32], strides = [1, 1]} : vector<8x256xf32> to vector<8x32xf32>
    %50 = tpu.concatenate %42, %43, %44, %45, %46, %47, %48, %49 in 1 : vector<8x32xf32>, vector<8x32xf32>, vector<8x32xf32>, vector<8x32xf32>, vector<8x32xf32>, vector<8x32xf32>, vector<8x32xf32>, vector<8x32xf32> -> vector<8x256xf32>
    %51 = vector.extract_strided_slice %11 {offsets = [0, 0], sizes = [8, 32], strides = [1, 1]} : vector<8x256xf32> to vector<8x32xf32>
    %52 = vector.extract_strided_slice %10 {offsets = [0, 32], sizes = [8, 32], strides = [1, 1]} : vector<8x256xf32> to vector<8x32xf32>
    %53 = vector.extract_strided_slice %11 {offsets = [0, 64], sizes = [8, 32], strides = [1, 1]} : vector<8x256xf32> to vector<8x32xf32>
    %54 = vector.extract_strided_slice %10 {offsets = [0, 96], sizes = [8, 32], strides = [1, 1]} : vector<8x256xf32> to vector<8x32xf32>
    %55 = vector.extract_strided_slice %11 {offsets = [0, 128], sizes = [8, 32], strides = [1, 1]} : vector<8x256xf32> to vector<8x32xf32>
    %56 = vector.extract_strided_slice %10 {offsets = [0, 160], sizes = [8, 32], strides = [1, 1]} : vector<8x256xf32> to vector<8x32xf32>
    %57 = vector.extract_strided_slice %11 {offsets = [0, 192], sizes = [8, 32], strides = [1, 1]} : vector<8x256xf32> to vector<8x32xf32>
    %58 = vector.extract_strided_slice %10 {offsets = [0, 224], sizes = [8, 32], strides = [1, 1]} : vector<8x256xf32> to vector<8x32xf32>
    %59 = tpu.concatenate %51, %52, %53, %54, %55, %56, %57, %58 in 1 : vector<8x32xf32>, vector<8x32xf32>, vector<8x32xf32>, vector<8x32xf32>, vector<8x32xf32>, vector<8x32xf32>, vector<8x32xf32>, vector<8x32xf32> -> vector<8x256xf32>
    %60 = vector.extract_strided_slice %12 {offsets = [0, 0], sizes = [8, 32], strides = [1, 1]} : vector<8x256xf32> to vector<8x32xf32>
    %61 = vector.extract_strided_slice %9 {offsets = [0, 32], sizes = [8, 32], strides = [1, 1]} : vector<8x256xf32> to vector<8x32xf32>
    %62 = vector.extract_strided_slice %12 {offsets = [0, 64], sizes = [8, 32], strides = [1, 1]} : vector<8x256xf32> to vector<8x32xf32>
    %63 = vector.extract_strided_slice %9 {offsets = [0, 96], sizes = [8, 32], strides = [1, 1]} : vector<8x256xf32> to vector<8x32xf32>
    %64 = vector.extract_strided_slice %12 {offsets = [0, 128], sizes = [8, 32], strides = [1, 1]} : vector<8x256xf32> to vector<8x32xf32>
    %65 = vector.extract_strided_slice %9 {offsets = [0, 160], sizes = [8, 32], strides = [1, 1]} : vector<8x256xf32> to vector<8x32xf32>
    %66 = vector.extract_strided_slice %12 {offsets = [0, 192], sizes = [8, 32], strides = [1, 1]} : vector<8x256xf32> to vector<8x32xf32>
    %67 = vector.extract_strided_slice %9 {offsets = [0, 224], sizes = [8, 32], strides = [1, 1]} : vector<8x256xf32> to vector<8x32xf32>
    %68 = tpu.concatenate %60, %61, %62, %63, %64, %65, %66, %67 in 1 : vector<8x32xf32>, vector<8x32xf32>, vector<8x32xf32>, vector<8x32xf32>, vector<8x32xf32>, vector<8x32xf32>, vector<8x32xf32>, vector<8x32xf32> -> vector<8x256xf32>
    %69 = vector.extract_strided_slice %13 {offsets = [0, 0], sizes = [8, 32], strides = [1, 1]} : vector<8x256xf32> to vector<8x32xf32>
    %70 = vector.extract_strided_slice %8 {offsets = [0, 32], sizes = [8, 32], strides = [1, 1]} : vector<8x256xf32> to vector<8x32xf32>
    %71 = vector.extract_strided_slice %13 {offsets = [0, 64], sizes = [8, 32], strides = [1, 1]} : vector<8x256xf32> to vector<8x32xf32>
    %72 = vector.extract_strided_slice %8 {offsets = [0, 96], sizes = [8, 32], strides = [1, 1]} : vector<8x256xf32> to vector<8x32xf32>
    %73 = vector.extract_strided_slice %13 {offsets = [0, 128], sizes = [8, 32], strides = [1, 1]} : vector<8x256xf32> to vector<8x32xf32>
    %74 = vector.extract_strided_slice %8 {offsets = [0, 160], sizes = [8, 32], strides = [1, 1]} : vector<8x256xf32> to vector<8x32xf32>
    %75 = vector.extract_strided_slice %13 {offsets = [0, 192], sizes = [8, 32], strides = [1, 1]} : vector<8x256xf32> to vector<8x32xf32>
    %76 = vector.extract_strided_slice %8 {offsets = [0, 224], sizes = [8, 32], strides = [1, 1]} : vector<8x256xf32> to vector<8x32xf32>
    %77 = tpu.concatenate %69, %70, %71, %72, %73, %74, %75, %76 in 1 : vector<8x32xf32>, vector<8x32xf32>, vector<8x32xf32>, vector<8x32xf32>, vector<8x32xf32>, vector<8x32xf32>, vector<8x32xf32>, vector<8x32xf32> -> vector<8x256xf32>
    %78 = vector.extract_strided_slice %14 {offsets = [0, 0], sizes = [8, 32], strides = [1, 1]} : vector<8x256xf32> to vector<8x32xf32>
    %79 = vector.extract_strided_slice %7 {offsets = [0, 32], sizes = [8, 32], strides = [1, 1]} : vector<8x256xf32> to vector<8x32xf32>
    %80 = vector.extract_strided_slice %14 {offsets = [0, 64], sizes = [8, 32], strides = [1, 1]} : vector<8x256xf32> to vector<8x32xf32>
    %81 = vector.extract_strided_slice %7 {offsets = [0, 96], sizes = [8, 32], strides = [1, 1]} : vector<8x256xf32> to vector<8x32xf32>
    %82 = vector.extract_strided_slice %14 {offsets = [0, 128], sizes = [8, 32], strides = [1, 1]} : vector<8x256xf32> to vector<8x32xf32>
    %83 = vector.extract_strided_slice %7 {offsets = [0, 160], sizes = [8, 32], strides = [1, 1]} : vector<8x256xf32> to vector<8x32xf32>
    %84 = vector.extract_strided_slice %14 {offsets = [0, 192], sizes = [8, 32], strides = [1, 1]} : vector<8x256xf32> to vector<8x32xf32>
    %85 = vector.extract_strided_slice %7 {offsets = [0, 224], sizes = [8, 32], strides = [1, 1]} : vector<8x256xf32> to vector<8x32xf32>
    %86 = tpu.concatenate %78, %79, %80, %81, %82, %83, %84, %85 in 1 : vector<8x32xf32>, vector<8x32xf32>, vector<8x32xf32>, vector<8x32xf32>, vector<8x32xf32>, vector<8x32xf32>, vector<8x32xf32>, vector<8x32xf32> -> vector<8x256xf32>
    %87 = arith.negf %23 : vector<8x256xf32>
    %88 = math.exp %87 : vector<8x256xf32>
    %cst_7 = arith.constant 1.000000e+00 : f32
    %89 = vector.broadcast %cst_7 : f32 to vector<8x256xf32>
    %90 = arith.addf %89, %88 : vector<8x256xf32>
    %91 = arith.divf %89, %90 : vector<8x256xf32>
    %92 = math.tanh %23 : vector<8x256xf32>
    %93 = vector.extract_strided_slice %91 {offsets = [0, 0], sizes = [8, 64], strides = [1, 1]} : vector<8x256xf32> to vector<8x64xf32>
    %94 = vector.extract_strided_slice %92 {offsets = [0, 128], sizes = [8, 64], strides = [1, 1]} : vector<8x256xf32> to vector<8x64xf32>
    %95 = vector.extract_strided_slice %91 {offsets = [0, 192], sizes = [8, 64], strides = [1, 1]} : vector<8x256xf32> to vector<8x64xf32>
    %96 = arith.mulf %93, %94 : vector<8x64xf32>
    %97 = math.tanh %96 : vector<8x64xf32>
    %98 = arith.mulf %95, %97 : vector<8x64xf32>
    %cst_8 = arith.constant dense<0.000000e+00> : vector<8x256xf32>
    %99 = tpu.matmul %98, %1, %cst_8 {dimension_numbers = #tpu.dot_dimension_numbers<[1], [0], [0], [1], [0, 0, 1, 1], [], []>} : vector<8x64xf32>, vector<64x256xf32>, vector<8x256xf32> -> vector<8x256xf32>
    %100 = arith.addf %32, %99 : vector<8x256xf32>
    %101 = arith.negf %100 : vector<8x256xf32>
    %102 = math.exp %101 : vector<8x256xf32>
    %cst_9 = arith.constant 1.000000e+00 : f32
    %103 = vector.broadcast %cst_9 : f32 to vector<8x256xf32>
    %104 = arith.addf %103, %102 : vector<8x256xf32>
    %105 = arith.divf %103, %104 : vector<8x256xf32>
    %106 = math.tanh %100 : vector<8x256xf32>
    %107 = vector.extract_strided_slice %105 {offsets = [0, 0], sizes = [8, 64], strides = [1, 1]} : vector<8x256xf32> to vector<8x64xf32>
    %108 = vector.extract_strided_slice %105 {offsets = [0, 64], sizes = [8, 64], strides = [1, 1]} : vector<8x256xf32> to vector<8x64xf32>
    %109 = vector.extract_strided_slice %106 {offsets = [0, 128], sizes = [8, 64], strides = [1, 1]} : vector<8x256xf32> to vector<8x64xf32>
    %110 = vector.extract_strided_slice %105 {offsets = [0, 192], sizes = [8, 64], strides = [1, 1]} : vector<8x256xf32> to vector<8x64xf32>
    %111 = arith.mulf %108, %96 : vector<8x64xf32>
    %112 = arith.mulf %107, %109 : vector<8x64xf32>
    %113 = arith.addf %111, %112 : vector<8x64xf32>
    %114 = math.tanh %113 : vector<8x64xf32>
    %115 = arith.mulf %110, %114 : vector<8x64xf32>
    %cst_10 = arith.constant dense<0.000000e+00> : vector<8x256xf32>
    %116 = tpu.matmul %115, %1, %cst_10 {dimension_numbers = #tpu.dot_dimension_numbers<[1], [0], [0], [1], [0, 0, 1, 1], [], []>} : vector<8x64xf32>, vector<64x256xf32>, vector<8x256xf32> -> vector<8x256xf32>
    %117 = arith.addf %41, %116 : vector<8x256xf32>
    %118 = arith.negf %117 : vector<8x256xf32>
    %119 = math.exp %118 : vector<8x256xf32>
    %cst_11 = arith.constant 1.000000e+00 : f32
    %120 = vector.broadcast %cst_11 : f32 to vector<8x256xf32>
    %121 = arith.addf %120, %119 : vector<8x256xf32>
    %122 = arith.divf %120, %121 : vector<8x256xf32>
    %123 = math.tanh %117 : vector<8x256xf32>
    %124 = vector.extract_strided_slice %122 {offsets = [0, 0], sizes = [8, 64], strides = [1, 1]} : vector<8x256xf32> to vector<8x64xf32>
    %125 = vector.extract_strided_slice %122 {offsets = [0, 64], sizes = [8, 64], strides = [1, 1]} : vector<8x256xf32> to vector<8x64xf32>
    %126 = vector.extract_strided_slice %123 {offsets = [0, 128], sizes = [8, 64], strides = [1, 1]} : vector<8x256xf32> to vector<8x64xf32>
    %127 = vector.extract_strided_slice %122 {offsets = [0, 192], sizes = [8, 64], strides = [1, 1]} : vector<8x256xf32> to vector<8x64xf32>
    %128 = arith.mulf %125, %113 : vector<8x64xf32>
    %129 = arith.mulf %124, %126 : vector<8x64xf32>
    %130 = arith.addf %128, %129 : vector<8x64xf32>
    %131 = math.tanh %130 : vector<8x64xf32>
    %132 = arith.mulf %127, %131 : vector<8x64xf32>
    %cst_12 = arith.constant dense<0.000000e+00> : vector<8x256xf32>
    %133 = tpu.matmul %132, %1, %cst_12 {dimension_numbers = #tpu.dot_dimension_numbers<[1], [0], [0], [1], [0, 0, 1, 1], [], []>} : vector<8x64xf32>, vector<64x256xf32>, vector<8x256xf32> -> vector<8x256xf32>
    %134 = arith.addf %50, %133 : vector<8x256xf32>
    %135 = arith.negf %134 : vector<8x256xf32>
    %136 = math.exp %135 : vector<8x256xf32>
    %cst_13 = arith.constant 1.000000e+00 : f32
    %137 = vector.broadcast %cst_13 : f32 to vector<8x256xf32>
    %138 = arith.addf %137, %136 : vector<8x256xf32>
    %139 = arith.divf %137, %138 : vector<8x256xf32>
    %140 = math.tanh %134 : vector<8x256xf32>
    %141 = vector.extract_strided_slice %139 {offsets = [0, 0], sizes = [8, 64], strides = [1, 1]} : vector<8x256xf32> to vector<8x64xf32>
    %142 = vector.extract_strided_slice %139 {offsets = [0, 64], sizes = [8, 64], strides = [1, 1]} : vector<8x256xf32> to vector<8x64xf32>
    %143 = vector.extract_strided_slice %140 {offsets = [0, 128], sizes = [8, 64], strides = [1, 1]} : vector<8x256xf32> to vector<8x64xf32>
    %144 = vector.extract_strided_slice %139 {offsets = [0, 192], sizes = [8, 64], strides = [1, 1]} : vector<8x256xf32> to vector<8x64xf32>
    %145 = arith.mulf %142, %130 : vector<8x64xf32>
    %146 = arith.mulf %141, %143 : vector<8x64xf32>
    %147 = arith.addf %145, %146 : vector<8x64xf32>
    %148 = math.tanh %147 : vector<8x64xf32>
    %149 = arith.mulf %144, %148 : vector<8x64xf32>
    %cst_14 = arith.constant dense<0.000000e+00> : vector<8x256xf32>
    %150 = tpu.matmul %149, %1, %cst_14 {dimension_numbers = #tpu.dot_dimension_numbers<[1], [0], [0], [1], [0, 0, 1, 1], [], []>} : vector<8x64xf32>, vector<64x256xf32>, vector<8x256xf32> -> vector<8x256xf32>
    %151 = arith.addf %59, %150 : vector<8x256xf32>
    %152 = arith.negf %151 : vector<8x256xf32>
    %153 = math.exp %152 : vector<8x256xf32>
    %cst_15 = arith.constant 1.000000e+00 : f32
    %154 = vector.broadcast %cst_15 : f32 to vector<8x256xf32>
    %155 = arith.addf %154, %153 : vector<8x256xf32>
    %156 = arith.divf %154, %155 : vector<8x256xf32>
    %157 = math.tanh %151 : vector<8x256xf32>
    %158 = vector.extract_strided_slice %156 {offsets = [0, 0], sizes = [8, 64], strides = [1, 1]} : vector<8x256xf32> to vector<8x64xf32>
    %159 = vector.extract_strided_slice %156 {offsets = [0, 64], sizes = [8, 64], strides = [1, 1]} : vector<8x256xf32> to vector<8x64xf32>
    %160 = vector.extract_strided_slice %157 {offsets = [0, 128], sizes = [8, 64], strides = [1, 1]} : vector<8x256xf32> to vector<8x64xf32>
    %161 = vector.extract_strided_slice %156 {offsets = [0, 192], sizes = [8, 64], strides = [1, 1]} : vector<8x256xf32> to vector<8x64xf32>
    %162 = arith.mulf %159, %147 : vector<8x64xf32>
    %163 = arith.mulf %158, %160 : vector<8x64xf32>
    %164 = arith.addf %162, %163 : vector<8x64xf32>
    %165 = math.tanh %164 : vector<8x64xf32>
    %166 = arith.mulf %161, %165 : vector<8x64xf32>
    %cst_16 = arith.constant dense<0.000000e+00> : vector<8x256xf32>
    %167 = tpu.matmul %166, %1, %cst_16 {dimension_numbers = #tpu.dot_dimension_numbers<[1], [0], [0], [1], [0, 0, 1, 1], [], []>} : vector<8x64xf32>, vector<64x256xf32>, vector<8x256xf32> -> vector<8x256xf32>
    %168 = arith.addf %68, %167 : vector<8x256xf32>
    %169 = arith.negf %168 : vector<8x256xf32>
    %170 = math.exp %169 : vector<8x256xf32>
    %cst_17 = arith.constant 1.000000e+00 : f32
    %171 = vector.broadcast %cst_17 : f32 to vector<8x256xf32>
    %172 = arith.addf %171, %170 : vector<8x256xf32>
    %173 = arith.divf %171, %172 : vector<8x256xf32>
    %174 = math.tanh %168 : vector<8x256xf32>
    %175 = vector.extract_strided_slice %173 {offsets = [0, 0], sizes = [8, 64], strides = [1, 1]} : vector<8x256xf32> to vector<8x64xf32>
    %176 = vector.extract_strided_slice %173 {offsets = [0, 64], sizes = [8, 64], strides = [1, 1]} : vector<8x256xf32> to vector<8x64xf32>
    %177 = vector.extract_strided_slice %174 {offsets = [0, 128], sizes = [8, 64], strides = [1, 1]} : vector<8x256xf32> to vector<8x64xf32>
    %178 = vector.extract_strided_slice %173 {offsets = [0, 192], sizes = [8, 64], strides = [1, 1]} : vector<8x256xf32> to vector<8x64xf32>
    %179 = arith.mulf %176, %164 : vector<8x64xf32>
    %180 = arith.mulf %175, %177 : vector<8x64xf32>
    %181 = arith.addf %179, %180 : vector<8x64xf32>
    %182 = math.tanh %181 : vector<8x64xf32>
    %183 = arith.mulf %178, %182 : vector<8x64xf32>
    %cst_18 = arith.constant dense<0.000000e+00> : vector<8x256xf32>
    %184 = tpu.matmul %183, %1, %cst_18 {dimension_numbers = #tpu.dot_dimension_numbers<[1], [0], [0], [1], [0, 0, 1, 1], [], []>} : vector<8x64xf32>, vector<64x256xf32>, vector<8x256xf32> -> vector<8x256xf32>
    %185 = arith.addf %77, %184 : vector<8x256xf32>
    %186 = arith.negf %185 : vector<8x256xf32>
    %187 = math.exp %186 : vector<8x256xf32>
    %cst_19 = arith.constant 1.000000e+00 : f32
    %188 = vector.broadcast %cst_19 : f32 to vector<8x256xf32>
    %189 = arith.addf %188, %187 : vector<8x256xf32>
    %190 = arith.divf %188, %189 : vector<8x256xf32>
    %191 = math.tanh %185 : vector<8x256xf32>
    %192 = vector.extract_strided_slice %190 {offsets = [0, 0], sizes = [8, 64], strides = [1, 1]} : vector<8x256xf32> to vector<8x64xf32>
    %193 = vector.extract_strided_slice %190 {offsets = [0, 64], sizes = [8, 64], strides = [1, 1]} : vector<8x256xf32> to vector<8x64xf32>
    %194 = vector.extract_strided_slice %191 {offsets = [0, 128], sizes = [8, 64], strides = [1, 1]} : vector<8x256xf32> to vector<8x64xf32>
    %195 = vector.extract_strided_slice %190 {offsets = [0, 192], sizes = [8, 64], strides = [1, 1]} : vector<8x256xf32> to vector<8x64xf32>
    %196 = arith.mulf %193, %181 : vector<8x64xf32>
    %197 = arith.mulf %192, %194 : vector<8x64xf32>
    %198 = arith.addf %196, %197 : vector<8x64xf32>
    %199 = math.tanh %198 : vector<8x64xf32>
    %200 = arith.mulf %195, %199 : vector<8x64xf32>
    %cst_20 = arith.constant dense<0.000000e+00> : vector<8x256xf32>
    %201 = tpu.matmul %200, %1, %cst_20 {dimension_numbers = #tpu.dot_dimension_numbers<[1], [0], [0], [1], [0, 0, 1, 1], [], []>} : vector<8x64xf32>, vector<64x256xf32>, vector<8x256xf32> -> vector<8x256xf32>
    %202 = arith.addf %86, %201 : vector<8x256xf32>
    %203 = arith.negf %202 : vector<8x256xf32>
    %204 = math.exp %203 : vector<8x256xf32>
    %cst_21 = arith.constant 1.000000e+00 : f32
    %205 = vector.broadcast %cst_21 : f32 to vector<8x256xf32>
    %206 = arith.addf %205, %204 : vector<8x256xf32>
    %207 = arith.divf %205, %206 : vector<8x256xf32>
    %208 = math.tanh %202 : vector<8x256xf32>
    %209 = vector.extract_strided_slice %207 {offsets = [0, 0], sizes = [8, 64], strides = [1, 1]} : vector<8x256xf32> to vector<8x64xf32>
    %210 = vector.extract_strided_slice %207 {offsets = [0, 64], sizes = [8, 64], strides = [1, 1]} : vector<8x256xf32> to vector<8x64xf32>
    %211 = vector.extract_strided_slice %208 {offsets = [0, 128], sizes = [8, 64], strides = [1, 1]} : vector<8x256xf32> to vector<8x64xf32>
    %212 = vector.extract_strided_slice %207 {offsets = [0, 192], sizes = [8, 64], strides = [1, 1]} : vector<8x256xf32> to vector<8x64xf32>
    %213 = arith.mulf %210, %198 : vector<8x64xf32>
    %214 = arith.mulf %209, %211 : vector<8x64xf32>
    %215 = arith.addf %213, %214 : vector<8x64xf32>
    %216 = math.tanh %215 : vector<8x64xf32>
    %217 = arith.mulf %212, %216 : vector<8x64xf32>
    %218 = vector.extract_strided_slice %98 {offsets = [0, 0], sizes = [8, 32], strides = [1, 1]} : vector<8x64xf32> to vector<8x32xf32>
    %219 = vector.extract_strided_slice %217 {offsets = [0, 32], sizes = [8, 32], strides = [1, 1]} : vector<8x64xf32> to vector<8x32xf32>
    %220 = tpu.concatenate %218, %219 in 1 : vector<8x32xf32>, vector<8x32xf32> -> vector<8x64xf32>
    %221 = vector.extract_strided_slice %115 {offsets = [0, 0], sizes = [8, 32], strides = [1, 1]} : vector<8x64xf32> to vector<8x32xf32>
    %222 = vector.extract_strided_slice %200 {offsets = [0, 32], sizes = [8, 32], strides = [1, 1]} : vector<8x64xf32> to vector<8x32xf32>
    %223 = tpu.concatenate %221, %222 in 1 : vector<8x32xf32>, vector<8x32xf32> -> vector<8x64xf32>
    %224 = vector.extract_strided_slice %132 {offsets = [0, 0], sizes = [8, 32], strides = [1, 1]} : vector<8x64xf32> to vector<8x32xf32>
    %225 = vector.extract_strided_slice %183 {offsets = [0, 32], sizes = [8, 32], strides = [1, 1]} : vector<8x64xf32> to vector<8x32xf32>
    %226 = tpu.concatenate %224, %225 in 1 : vector<8x32xf32>, vector<8x32xf32> -> vector<8x64xf32>
    %227 = vector.extract_strided_slice %149 {offsets = [0, 0], sizes = [8, 32], strides = [1, 1]} : vector<8x64xf32> to vector<8x32xf32>
    %228 = vector.extract_strided_slice %166 {offsets = [0, 32], sizes = [8, 32], strides = [1, 1]} : vector<8x64xf32> to vector<8x32xf32>
    %229 = tpu.concatenate %227, %228 in 1 : vector<8x32xf32>, vector<8x32xf32> -> vector<8x64xf32>
    %230 = vector.extract_strided_slice %166 {offsets = [0, 0], sizes = [8, 32], strides = [1, 1]} : vector<8x64xf32> to vector<8x32xf32>
    %231 = vector.extract_strided_slice %149 {offsets = [0, 32], sizes = [8, 32], strides = [1, 1]} : vector<8x64xf32> to vector<8x32xf32>
    %232 = tpu.concatenate %230, %231 in 1 : vector<8x32xf32>, vector<8x32xf32> -> vector<8x64xf32>
    %233 = vector.extract_strided_slice %183 {offsets = [0, 0], sizes = [8, 32], strides = [1, 1]} : vector<8x64xf32> to vector<8x32xf32>
    %234 = vector.extract_strided_slice %132 {offsets = [0, 32], sizes = [8, 32], strides = [1, 1]} : vector<8x64xf32> to vector<8x32xf32>
    %235 = tpu.concatenate %233, %234 in 1 : vector<8x32xf32>, vector<8x32xf32> -> vector<8x64xf32>
    %236 = vector.extract_strided_slice %200 {offsets = [0, 0], sizes = [8, 32], strides = [1, 1]} : vector<8x64xf32> to vector<8x32xf32>
    %237 = vector.extract_strided_slice %115 {offsets = [0, 32], sizes = [8, 32], strides = [1, 1]} : vector<8x64xf32> to vector<8x32xf32>
    %238 = tpu.concatenate %236, %237 in 1 : vector<8x32xf32>, vector<8x32xf32> -> vector<8x64xf32>
    %239 = vector.extract_strided_slice %217 {offsets = [0, 0], sizes = [8, 32], strides = [1, 1]} : vector<8x64xf32> to vector<8x32xf32>
    %240 = vector.extract_strided_slice %98 {offsets = [0, 32], sizes = [8, 32], strides = [1, 1]} : vector<8x64xf32> to vector<8x32xf32>
    %241 = tpu.concatenate %239, %240 in 1 : vector<8x32xf32>, vector<8x32xf32> -> vector<8x64xf32>
    %242 = tpu.concatenate %220, %223, %226, %229, %232, %235, %238, %241 in 0 : vector<8x64xf32>, vector<8x64xf32>, vector<8x64xf32>, vector<8x64xf32>, vector<8x64xf32>, vector<8x64xf32>, vector<8x64xf32>, vector<8x64xf32> -> vector<64x64xf32>
    %c0_22 = arith.constant 0 : index
    %c0_23 = arith.constant 0 : index
    %243 = vector.load %arg5[%c0_22, %c0_23] : memref<64x256xf32, #tpu.memory_space<vmem>>, vector<64x256xf32>
    %c0_24 = arith.constant 0 : index
    %c0_25 = arith.constant 0 : index
    %244 = vector.load %arg4[%c0_24, %c0_25] : memref<64x256xf32, #tpu.memory_space<vmem>>, vector<64x256xf32>
    %cst_26 = arith.constant dense<0.000000e+00> : vector<64x256xf32>
    %245 = tpu.matmul %242, %244, %cst_26 {dimension_numbers = #tpu.dot_dimension_numbers<[1], [0], [0], [1], [0, 0, 1, 1], [], []>} : vector<64x64xf32>, vector<64x256xf32>, vector<64x256xf32> -> vector<64x256xf32>
    %c0_27 = arith.constant 0 : index
    %c0_28 = arith.constant 0 : index
    %246 = vector.load %arg6[%c0_27, %c0_28] : memref<1x256xf32, #tpu.memory_space<vmem>>, vector<1x256xf32>
    %247 = vector.broadcast %246 : vector<1x256xf32> to vector<64x256xf32>
    %248 = arith.addf %245, %247 : vector<64x256xf32>
    %249 = vector.extract_strided_slice %248 {offsets = [0, 0], sizes = [8, 256], strides = [1, 1]} : vector<64x256xf32> to vector<8x256xf32>
    %250 = vector.extract_strided_slice %248 {offsets = [8, 0], sizes = [8, 256], strides = [1, 1]} : vector<64x256xf32> to vector<8x256xf32>
    %251 = vector.extract_strided_slice %248 {offsets = [16, 0], sizes = [8, 256], strides = [1, 1]} : vector<64x256xf32> to vector<8x256xf32>
    %252 = vector.extract_strided_slice %248 {offsets = [24, 0], sizes = [8, 256], strides = [1, 1]} : vector<64x256xf32> to vector<8x256xf32>
    %253 = vector.extract_strided_slice %248 {offsets = [32, 0], sizes = [8, 256], strides = [1, 1]} : vector<64x256xf32> to vector<8x256xf32>
    %254 = vector.extract_strided_slice %248 {offsets = [40, 0], sizes = [8, 256], strides = [1, 1]} : vector<64x256xf32> to vector<8x256xf32>
    %255 = vector.extract_strided_slice %248 {offsets = [48, 0], sizes = [8, 256], strides = [1, 1]} : vector<64x256xf32> to vector<8x256xf32>
    %256 = vector.extract_strided_slice %248 {offsets = [56, 0], sizes = [8, 256], strides = [1, 1]} : vector<64x256xf32> to vector<8x256xf32>
    %257 = vector.extract_strided_slice %249 {offsets = [0, 0], sizes = [8, 32], strides = [1, 1]} : vector<8x256xf32> to vector<8x32xf32>
    %258 = vector.extract_strided_slice %256 {offsets = [0, 32], sizes = [8, 32], strides = [1, 1]} : vector<8x256xf32> to vector<8x32xf32>
    %259 = vector.extract_strided_slice %249 {offsets = [0, 64], sizes = [8, 32], strides = [1, 1]} : vector<8x256xf32> to vector<8x32xf32>
    %260 = vector.extract_strided_slice %256 {offsets = [0, 96], sizes = [8, 32], strides = [1, 1]} : vector<8x256xf32> to vector<8x32xf32>
    %261 = vector.extract_strided_slice %249 {offsets = [0, 128], sizes = [8, 32], strides = [1, 1]} : vector<8x256xf32> to vector<8x32xf32>
    %262 = vector.extract_strided_slice %256 {offsets = [0, 160], sizes = [8, 32], strides = [1, 1]} : vector<8x256xf32> to vector<8x32xf32>
    %263 = vector.extract_strided_slice %249 {offsets = [0, 192], sizes = [8, 32], strides = [1, 1]} : vector<8x256xf32> to vector<8x32xf32>
    %264 = vector.extract_strided_slice %256 {offsets = [0, 224], sizes = [8, 32], strides = [1, 1]} : vector<8x256xf32> to vector<8x32xf32>
    %265 = tpu.concatenate %257, %258, %259, %260, %261, %262, %263, %264 in 1 : vector<8x32xf32>, vector<8x32xf32>, vector<8x32xf32>, vector<8x32xf32>, vector<8x32xf32>, vector<8x32xf32>, vector<8x32xf32>, vector<8x32xf32> -> vector<8x256xf32>
    %266 = vector.extract_strided_slice %250 {offsets = [0, 0], sizes = [8, 32], strides = [1, 1]} : vector<8x256xf32> to vector<8x32xf32>
    %267 = vector.extract_strided_slice %255 {offsets = [0, 32], sizes = [8, 32], strides = [1, 1]} : vector<8x256xf32> to vector<8x32xf32>
    %268 = vector.extract_strided_slice %250 {offsets = [0, 64], sizes = [8, 32], strides = [1, 1]} : vector<8x256xf32> to vector<8x32xf32>
    %269 = vector.extract_strided_slice %255 {offsets = [0, 96], sizes = [8, 32], strides = [1, 1]} : vector<8x256xf32> to vector<8x32xf32>
    %270 = vector.extract_strided_slice %250 {offsets = [0, 128], sizes = [8, 32], strides = [1, 1]} : vector<8x256xf32> to vector<8x32xf32>
    %271 = vector.extract_strided_slice %255 {offsets = [0, 160], sizes = [8, 32], strides = [1, 1]} : vector<8x256xf32> to vector<8x32xf32>
    %272 = vector.extract_strided_slice %250 {offsets = [0, 192], sizes = [8, 32], strides = [1, 1]} : vector<8x256xf32> to vector<8x32xf32>
    %273 = vector.extract_strided_slice %255 {offsets = [0, 224], sizes = [8, 32], strides = [1, 1]} : vector<8x256xf32> to vector<8x32xf32>
    %274 = tpu.concatenate %266, %267, %268, %269, %270, %271, %272, %273 in 1 : vector<8x32xf32>, vector<8x32xf32>, vector<8x32xf32>, vector<8x32xf32>, vector<8x32xf32>, vector<8x32xf32>, vector<8x32xf32>, vector<8x32xf32> -> vector<8x256xf32>
    %275 = vector.extract_strided_slice %251 {offsets = [0, 0], sizes = [8, 32], strides = [1, 1]} : vector<8x256xf32> to vector<8x32xf32>
    %276 = vector.extract_strided_slice %254 {offsets = [0, 32], sizes = [8, 32], strides = [1, 1]} : vector<8x256xf32> to vector<8x32xf32>
    %277 = vector.extract_strided_slice %251 {offsets = [0, 64], sizes = [8, 32], strides = [1, 1]} : vector<8x256xf32> to vector<8x32xf32>
    %278 = vector.extract_strided_slice %254 {offsets = [0, 96], sizes = [8, 32], strides = [1, 1]} : vector<8x256xf32> to vector<8x32xf32>
    %279 = vector.extract_strided_slice %251 {offsets = [0, 128], sizes = [8, 32], strides = [1, 1]} : vector<8x256xf32> to vector<8x32xf32>
    %280 = vector.extract_strided_slice %254 {offsets = [0, 160], sizes = [8, 32], strides = [1, 1]} : vector<8x256xf32> to vector<8x32xf32>
    %281 = vector.extract_strided_slice %251 {offsets = [0, 192], sizes = [8, 32], strides = [1, 1]} : vector<8x256xf32> to vector<8x32xf32>
    %282 = vector.extract_strided_slice %254 {offsets = [0, 224], sizes = [8, 32], strides = [1, 1]} : vector<8x256xf32> to vector<8x32xf32>
    %283 = tpu.concatenate %275, %276, %277, %278, %279, %280, %281, %282 in 1 : vector<8x32xf32>, vector<8x32xf32>, vector<8x32xf32>, vector<8x32xf32>, vector<8x32xf32>, vector<8x32xf32>, vector<8x32xf32>, vector<8x32xf32> -> vector<8x256xf32>
    %284 = vector.extract_strided_slice %252 {offsets = [0, 0], sizes = [8, 32], strides = [1, 1]} : vector<8x256xf32> to vector<8x32xf32>
    %285 = vector.extract_strided_slice %253 {offsets = [0, 32], sizes = [8, 32], strides = [1, 1]} : vector<8x256xf32> to vector<8x32xf32>
    %286 = vector.extract_strided_slice %252 {offsets = [0, 64], sizes = [8, 32], strides = [1, 1]} : vector<8x256xf32> to vector<8x32xf32>
    %287 = vector.extract_strided_slice %253 {offsets = [0, 96], sizes = [8, 32], strides = [1, 1]} : vector<8x256xf32> to vector<8x32xf32>
    %288 = vector.extract_strided_slice %252 {offsets = [0, 128], sizes = [8, 32], strides = [1, 1]} : vector<8x256xf32> to vector<8x32xf32>
    %289 = vector.extract_strided_slice %253 {offsets = [0, 160], sizes = [8, 32], strides = [1, 1]} : vector<8x256xf32> to vector<8x32xf32>
    %290 = vector.extract_strided_slice %252 {offsets = [0, 192], sizes = [8, 32], strides = [1, 1]} : vector<8x256xf32> to vector<8x32xf32>
    %291 = vector.extract_strided_slice %253 {offsets = [0, 224], sizes = [8, 32], strides = [1, 1]} : vector<8x256xf32> to vector<8x32xf32>
    %292 = tpu.concatenate %284, %285, %286, %287, %288, %289, %290, %291 in 1 : vector<8x32xf32>, vector<8x32xf32>, vector<8x32xf32>, vector<8x32xf32>, vector<8x32xf32>, vector<8x32xf32>, vector<8x32xf32>, vector<8x32xf32> -> vector<8x256xf32>
    %293 = vector.extract_strided_slice %253 {offsets = [0, 0], sizes = [8, 32], strides = [1, 1]} : vector<8x256xf32> to vector<8x32xf32>
    %294 = vector.extract_strided_slice %252 {offsets = [0, 32], sizes = [8, 32], strides = [1, 1]} : vector<8x256xf32> to vector<8x32xf32>
    %295 = vector.extract_strided_slice %253 {offsets = [0, 64], sizes = [8, 32], strides = [1, 1]} : vector<8x256xf32> to vector<8x32xf32>
    %296 = vector.extract_strided_slice %252 {offsets = [0, 96], sizes = [8, 32], strides = [1, 1]} : vector<8x256xf32> to vector<8x32xf32>
    %297 = vector.extract_strided_slice %253 {offsets = [0, 128], sizes = [8, 32], strides = [1, 1]} : vector<8x256xf32> to vector<8x32xf32>
    %298 = vector.extract_strided_slice %252 {offsets = [0, 160], sizes = [8, 32], strides = [1, 1]} : vector<8x256xf32> to vector<8x32xf32>
    %299 = vector.extract_strided_slice %253 {offsets = [0, 192], sizes = [8, 32], strides = [1, 1]} : vector<8x256xf32> to vector<8x32xf32>
    %300 = vector.extract_strided_slice %252 {offsets = [0, 224], sizes = [8, 32], strides = [1, 1]} : vector<8x256xf32> to vector<8x32xf32>
    %301 = tpu.concatenate %293, %294, %295, %296, %297, %298, %299, %300 in 1 : vector<8x32xf32>, vector<8x32xf32>, vector<8x32xf32>, vector<8x32xf32>, vector<8x32xf32>, vector<8x32xf32>, vector<8x32xf32>, vector<8x32xf32> -> vector<8x256xf32>
    %302 = vector.extract_strided_slice %254 {offsets = [0, 0], sizes = [8, 32], strides = [1, 1]} : vector<8x256xf32> to vector<8x32xf32>
    %303 = vector.extract_strided_slice %251 {offsets = [0, 32], sizes = [8, 32], strides = [1, 1]} : vector<8x256xf32> to vector<8x32xf32>
    %304 = vector.extract_strided_slice %254 {offsets = [0, 64], sizes = [8, 32], strides = [1, 1]} : vector<8x256xf32> to vector<8x32xf32>
    %305 = vector.extract_strided_slice %251 {offsets = [0, 96], sizes = [8, 32], strides = [1, 1]} : vector<8x256xf32> to vector<8x32xf32>
    %306 = vector.extract_strided_slice %254 {offsets = [0, 128], sizes = [8, 32], strides = [1, 1]} : vector<8x256xf32> to vector<8x32xf32>
    %307 = vector.extract_strided_slice %251 {offsets = [0, 160], sizes = [8, 32], strides = [1, 1]} : vector<8x256xf32> to vector<8x32xf32>
    %308 = vector.extract_strided_slice %254 {offsets = [0, 192], sizes = [8, 32], strides = [1, 1]} : vector<8x256xf32> to vector<8x32xf32>
    %309 = vector.extract_strided_slice %251 {offsets = [0, 224], sizes = [8, 32], strides = [1, 1]} : vector<8x256xf32> to vector<8x32xf32>
    %310 = tpu.concatenate %302, %303, %304, %305, %306, %307, %308, %309 in 1 : vector<8x32xf32>, vector<8x32xf32>, vector<8x32xf32>, vector<8x32xf32>, vector<8x32xf32>, vector<8x32xf32>, vector<8x32xf32>, vector<8x32xf32> -> vector<8x256xf32>
    %311 = vector.extract_strided_slice %255 {offsets = [0, 0], sizes = [8, 32], strides = [1, 1]} : vector<8x256xf32> to vector<8x32xf32>
    %312 = vector.extract_strided_slice %250 {offsets = [0, 32], sizes = [8, 32], strides = [1, 1]} : vector<8x256xf32> to vector<8x32xf32>
    %313 = vector.extract_strided_slice %255 {offsets = [0, 64], sizes = [8, 32], strides = [1, 1]} : vector<8x256xf32> to vector<8x32xf32>
    %314 = vector.extract_strided_slice %250 {offsets = [0, 96], sizes = [8, 32], strides = [1, 1]} : vector<8x256xf32> to vector<8x32xf32>
    %315 = vector.extract_strided_slice %255 {offsets = [0, 128], sizes = [8, 32], strides = [1, 1]} : vector<8x256xf32> to vector<8x32xf32>
    %316 = vector.extract_strided_slice %250 {offsets = [0, 160], sizes = [8, 32], strides = [1, 1]} : vector<8x256xf32> to vector<8x32xf32>
    %317 = vector.extract_strided_slice %255 {offsets = [0, 192], sizes = [8, 32], strides = [1, 1]} : vector<8x256xf32> to vector<8x32xf32>
    %318 = vector.extract_strided_slice %250 {offsets = [0, 224], sizes = [8, 32], strides = [1, 1]} : vector<8x256xf32> to vector<8x32xf32>
    %319 = tpu.concatenate %311, %312, %313, %314, %315, %316, %317, %318 in 1 : vector<8x32xf32>, vector<8x32xf32>, vector<8x32xf32>, vector<8x32xf32>, vector<8x32xf32>, vector<8x32xf32>, vector<8x32xf32>, vector<8x32xf32> -> vector<8x256xf32>
    %320 = vector.extract_strided_slice %256 {offsets = [0, 0], sizes = [8, 32], strides = [1, 1]} : vector<8x256xf32> to vector<8x32xf32>
    %321 = vector.extract_strided_slice %249 {offsets = [0, 32], sizes = [8, 32], strides = [1, 1]} : vector<8x256xf32> to vector<8x32xf32>
    %322 = vector.extract_strided_slice %256 {offsets = [0, 64], sizes = [8, 32], strides = [1, 1]} : vector<8x256xf32> to vector<8x32xf32>
    %323 = vector.extract_strided_slice %249 {offsets = [0, 96], sizes = [8, 32], strides = [1, 1]} : vector<8x256xf32> to vector<8x32xf32>
    %324 = vector.extract_strided_slice %256 {offsets = [0, 128], sizes = [8, 32], strides = [1, 1]} : vector<8x256xf32> to vector<8x32xf32>
    %325 = vector.extract_strided_slice %249 {offsets = [0, 160], sizes = [8, 32], strides = [1, 1]} : vector<8x256xf32> to vector<8x32xf32>
    %326 = vector.extract_strided_slice %256 {offsets = [0, 192], sizes = [8, 32], strides = [1, 1]} : vector<8x256xf32> to vector<8x32xf32>
    %327 = vector.extract_strided_slice %249 {offsets = [0, 224], sizes = [8, 32], strides = [1, 1]} : vector<8x256xf32> to vector<8x32xf32>
    %328 = tpu.concatenate %320, %321, %322, %323, %324, %325, %326, %327 in 1 : vector<8x32xf32>, vector<8x32xf32>, vector<8x32xf32>, vector<8x32xf32>, vector<8x32xf32>, vector<8x32xf32>, vector<8x32xf32>, vector<8x32xf32> -> vector<8x256xf32>
    %329 = arith.negf %265 : vector<8x256xf32>
    %330 = math.exp %329 : vector<8x256xf32>
    %cst_29 = arith.constant 1.000000e+00 : f32
    %331 = vector.broadcast %cst_29 : f32 to vector<8x256xf32>
    %332 = arith.addf %331, %330 : vector<8x256xf32>
    %333 = arith.divf %331, %332 : vector<8x256xf32>
    %334 = math.tanh %265 : vector<8x256xf32>
    %335 = vector.extract_strided_slice %333 {offsets = [0, 0], sizes = [8, 64], strides = [1, 1]} : vector<8x256xf32> to vector<8x64xf32>
    %336 = vector.extract_strided_slice %334 {offsets = [0, 128], sizes = [8, 64], strides = [1, 1]} : vector<8x256xf32> to vector<8x64xf32>
    %337 = vector.extract_strided_slice %333 {offsets = [0, 192], sizes = [8, 64], strides = [1, 1]} : vector<8x256xf32> to vector<8x64xf32>
    %338 = arith.mulf %335, %336 : vector<8x64xf32>
    %339 = math.tanh %338 : vector<8x64xf32>
    %340 = arith.mulf %337, %339 : vector<8x64xf32>
    %cst_30 = arith.constant dense<0.000000e+00> : vector<8x256xf32>
    %341 = tpu.matmul %340, %243, %cst_30 {dimension_numbers = #tpu.dot_dimension_numbers<[1], [0], [0], [1], [0, 0, 1, 1], [], []>} : vector<8x64xf32>, vector<64x256xf32>, vector<8x256xf32> -> vector<8x256xf32>
    %342 = arith.addf %274, %341 : vector<8x256xf32>
    %343 = arith.negf %342 : vector<8x256xf32>
    %344 = math.exp %343 : vector<8x256xf32>
    %cst_31 = arith.constant 1.000000e+00 : f32
    %345 = vector.broadcast %cst_31 : f32 to vector<8x256xf32>
    %346 = arith.addf %345, %344 : vector<8x256xf32>
    %347 = arith.divf %345, %346 : vector<8x256xf32>
    %348 = math.tanh %342 : vector<8x256xf32>
    %349 = vector.extract_strided_slice %347 {offsets = [0, 0], sizes = [8, 64], strides = [1, 1]} : vector<8x256xf32> to vector<8x64xf32>
    %350 = vector.extract_strided_slice %347 {offsets = [0, 64], sizes = [8, 64], strides = [1, 1]} : vector<8x256xf32> to vector<8x64xf32>
    %351 = vector.extract_strided_slice %348 {offsets = [0, 128], sizes = [8, 64], strides = [1, 1]} : vector<8x256xf32> to vector<8x64xf32>
    %352 = vector.extract_strided_slice %347 {offsets = [0, 192], sizes = [8, 64], strides = [1, 1]} : vector<8x256xf32> to vector<8x64xf32>
    %353 = arith.mulf %350, %338 : vector<8x64xf32>
    %354 = arith.mulf %349, %351 : vector<8x64xf32>
    %355 = arith.addf %353, %354 : vector<8x64xf32>
    %356 = math.tanh %355 : vector<8x64xf32>
    %357 = arith.mulf %352, %356 : vector<8x64xf32>
    %cst_32 = arith.constant dense<0.000000e+00> : vector<8x256xf32>
    %358 = tpu.matmul %357, %243, %cst_32 {dimension_numbers = #tpu.dot_dimension_numbers<[1], [0], [0], [1], [0, 0, 1, 1], [], []>} : vector<8x64xf32>, vector<64x256xf32>, vector<8x256xf32> -> vector<8x256xf32>
    %359 = arith.addf %283, %358 : vector<8x256xf32>
    %360 = arith.negf %359 : vector<8x256xf32>
    %361 = math.exp %360 : vector<8x256xf32>
    %cst_33 = arith.constant 1.000000e+00 : f32
    %362 = vector.broadcast %cst_33 : f32 to vector<8x256xf32>
    %363 = arith.addf %362, %361 : vector<8x256xf32>
    %364 = arith.divf %362, %363 : vector<8x256xf32>
    %365 = math.tanh %359 : vector<8x256xf32>
    %366 = vector.extract_strided_slice %364 {offsets = [0, 0], sizes = [8, 64], strides = [1, 1]} : vector<8x256xf32> to vector<8x64xf32>
    %367 = vector.extract_strided_slice %364 {offsets = [0, 64], sizes = [8, 64], strides = [1, 1]} : vector<8x256xf32> to vector<8x64xf32>
    %368 = vector.extract_strided_slice %365 {offsets = [0, 128], sizes = [8, 64], strides = [1, 1]} : vector<8x256xf32> to vector<8x64xf32>
    %369 = vector.extract_strided_slice %364 {offsets = [0, 192], sizes = [8, 64], strides = [1, 1]} : vector<8x256xf32> to vector<8x64xf32>
    %370 = arith.mulf %367, %355 : vector<8x64xf32>
    %371 = arith.mulf %366, %368 : vector<8x64xf32>
    %372 = arith.addf %370, %371 : vector<8x64xf32>
    %373 = math.tanh %372 : vector<8x64xf32>
    %374 = arith.mulf %369, %373 : vector<8x64xf32>
    %cst_34 = arith.constant dense<0.000000e+00> : vector<8x256xf32>
    %375 = tpu.matmul %374, %243, %cst_34 {dimension_numbers = #tpu.dot_dimension_numbers<[1], [0], [0], [1], [0, 0, 1, 1], [], []>} : vector<8x64xf32>, vector<64x256xf32>, vector<8x256xf32> -> vector<8x256xf32>
    %376 = arith.addf %292, %375 : vector<8x256xf32>
    %377 = arith.negf %376 : vector<8x256xf32>
    %378 = math.exp %377 : vector<8x256xf32>
    %cst_35 = arith.constant 1.000000e+00 : f32
    %379 = vector.broadcast %cst_35 : f32 to vector<8x256xf32>
    %380 = arith.addf %379, %378 : vector<8x256xf32>
    %381 = arith.divf %379, %380 : vector<8x256xf32>
    %382 = math.tanh %376 : vector<8x256xf32>
    %383 = vector.extract_strided_slice %381 {offsets = [0, 0], sizes = [8, 64], strides = [1, 1]} : vector<8x256xf32> to vector<8x64xf32>
    %384 = vector.extract_strided_slice %381 {offsets = [0, 64], sizes = [8, 64], strides = [1, 1]} : vector<8x256xf32> to vector<8x64xf32>
    %385 = vector.extract_strided_slice %382 {offsets = [0, 128], sizes = [8, 64], strides = [1, 1]} : vector<8x256xf32> to vector<8x64xf32>
    %386 = vector.extract_strided_slice %381 {offsets = [0, 192], sizes = [8, 64], strides = [1, 1]} : vector<8x256xf32> to vector<8x64xf32>
    %387 = arith.mulf %384, %372 : vector<8x64xf32>
    %388 = arith.mulf %383, %385 : vector<8x64xf32>
    %389 = arith.addf %387, %388 : vector<8x64xf32>
    %390 = math.tanh %389 : vector<8x64xf32>
    %391 = arith.mulf %386, %390 : vector<8x64xf32>
    %cst_36 = arith.constant dense<0.000000e+00> : vector<8x256xf32>
    %392 = tpu.matmul %391, %243, %cst_36 {dimension_numbers = #tpu.dot_dimension_numbers<[1], [0], [0], [1], [0, 0, 1, 1], [], []>} : vector<8x64xf32>, vector<64x256xf32>, vector<8x256xf32> -> vector<8x256xf32>
    %393 = arith.addf %301, %392 : vector<8x256xf32>
    %394 = arith.negf %393 : vector<8x256xf32>
    %395 = math.exp %394 : vector<8x256xf32>
    %cst_37 = arith.constant 1.000000e+00 : f32
    %396 = vector.broadcast %cst_37 : f32 to vector<8x256xf32>
    %397 = arith.addf %396, %395 : vector<8x256xf32>
    %398 = arith.divf %396, %397 : vector<8x256xf32>
    %399 = math.tanh %393 : vector<8x256xf32>
    %400 = vector.extract_strided_slice %398 {offsets = [0, 0], sizes = [8, 64], strides = [1, 1]} : vector<8x256xf32> to vector<8x64xf32>
    %401 = vector.extract_strided_slice %398 {offsets = [0, 64], sizes = [8, 64], strides = [1, 1]} : vector<8x256xf32> to vector<8x64xf32>
    %402 = vector.extract_strided_slice %399 {offsets = [0, 128], sizes = [8, 64], strides = [1, 1]} : vector<8x256xf32> to vector<8x64xf32>
    %403 = vector.extract_strided_slice %398 {offsets = [0, 192], sizes = [8, 64], strides = [1, 1]} : vector<8x256xf32> to vector<8x64xf32>
    %404 = arith.mulf %401, %389 : vector<8x64xf32>
    %405 = arith.mulf %400, %402 : vector<8x64xf32>
    %406 = arith.addf %404, %405 : vector<8x64xf32>
    %407 = math.tanh %406 : vector<8x64xf32>
    %408 = arith.mulf %403, %407 : vector<8x64xf32>
    %cst_38 = arith.constant dense<0.000000e+00> : vector<8x256xf32>
    %409 = tpu.matmul %408, %243, %cst_38 {dimension_numbers = #tpu.dot_dimension_numbers<[1], [0], [0], [1], [0, 0, 1, 1], [], []>} : vector<8x64xf32>, vector<64x256xf32>, vector<8x256xf32> -> vector<8x256xf32>
    %410 = arith.addf %310, %409 : vector<8x256xf32>
    %411 = arith.negf %410 : vector<8x256xf32>
    %412 = math.exp %411 : vector<8x256xf32>
    %cst_39 = arith.constant 1.000000e+00 : f32
    %413 = vector.broadcast %cst_39 : f32 to vector<8x256xf32>
    %414 = arith.addf %413, %412 : vector<8x256xf32>
    %415 = arith.divf %413, %414 : vector<8x256xf32>
    %416 = math.tanh %410 : vector<8x256xf32>
    %417 = vector.extract_strided_slice %415 {offsets = [0, 0], sizes = [8, 64], strides = [1, 1]} : vector<8x256xf32> to vector<8x64xf32>
    %418 = vector.extract_strided_slice %415 {offsets = [0, 64], sizes = [8, 64], strides = [1, 1]} : vector<8x256xf32> to vector<8x64xf32>
    %419 = vector.extract_strided_slice %416 {offsets = [0, 128], sizes = [8, 64], strides = [1, 1]} : vector<8x256xf32> to vector<8x64xf32>
    %420 = vector.extract_strided_slice %415 {offsets = [0, 192], sizes = [8, 64], strides = [1, 1]} : vector<8x256xf32> to vector<8x64xf32>
    %421 = arith.mulf %418, %406 : vector<8x64xf32>
    %422 = arith.mulf %417, %419 : vector<8x64xf32>
    %423 = arith.addf %421, %422 : vector<8x64xf32>
    %424 = math.tanh %423 : vector<8x64xf32>
    %425 = arith.mulf %420, %424 : vector<8x64xf32>
    %cst_40 = arith.constant dense<0.000000e+00> : vector<8x256xf32>
    %426 = tpu.matmul %425, %243, %cst_40 {dimension_numbers = #tpu.dot_dimension_numbers<[1], [0], [0], [1], [0, 0, 1, 1], [], []>} : vector<8x64xf32>, vector<64x256xf32>, vector<8x256xf32> -> vector<8x256xf32>
    %427 = arith.addf %319, %426 : vector<8x256xf32>
    %428 = arith.negf %427 : vector<8x256xf32>
    %429 = math.exp %428 : vector<8x256xf32>
    %cst_41 = arith.constant 1.000000e+00 : f32
    %430 = vector.broadcast %cst_41 : f32 to vector<8x256xf32>
    %431 = arith.addf %430, %429 : vector<8x256xf32>
    %432 = arith.divf %430, %431 : vector<8x256xf32>
    %433 = math.tanh %427 : vector<8x256xf32>
    %434 = vector.extract_strided_slice %432 {offsets = [0, 0], sizes = [8, 64], strides = [1, 1]} : vector<8x256xf32> to vector<8x64xf32>
    %435 = vector.extract_strided_slice %432 {offsets = [0, 64], sizes = [8, 64], strides = [1, 1]} : vector<8x256xf32> to vector<8x64xf32>
    %436 = vector.extract_strided_slice %433 {offsets = [0, 128], sizes = [8, 64], strides = [1, 1]} : vector<8x256xf32> to vector<8x64xf32>
    %437 = vector.extract_strided_slice %432 {offsets = [0, 192], sizes = [8, 64], strides = [1, 1]} : vector<8x256xf32> to vector<8x64xf32>
    %438 = arith.mulf %435, %423 : vector<8x64xf32>
    %439 = arith.mulf %434, %436 : vector<8x64xf32>
    %440 = arith.addf %438, %439 : vector<8x64xf32>
    %441 = math.tanh %440 : vector<8x64xf32>
    %442 = arith.mulf %437, %441 : vector<8x64xf32>
    %cst_42 = arith.constant dense<0.000000e+00> : vector<8x256xf32>
    %443 = tpu.matmul %442, %243, %cst_42 {dimension_numbers = #tpu.dot_dimension_numbers<[1], [0], [0], [1], [0, 0, 1, 1], [], []>} : vector<8x64xf32>, vector<64x256xf32>, vector<8x256xf32> -> vector<8x256xf32>
    %444 = arith.addf %328, %443 : vector<8x256xf32>
    %445 = arith.negf %444 : vector<8x256xf32>
    %446 = math.exp %445 : vector<8x256xf32>
    %cst_43 = arith.constant 1.000000e+00 : f32
    %447 = vector.broadcast %cst_43 : f32 to vector<8x256xf32>
    %448 = arith.addf %447, %446 : vector<8x256xf32>
    %449 = arith.divf %447, %448 : vector<8x256xf32>
    %450 = math.tanh %444 : vector<8x256xf32>
    %451 = vector.extract_strided_slice %449 {offsets = [0, 0], sizes = [8, 64], strides = [1, 1]} : vector<8x256xf32> to vector<8x64xf32>
    %452 = vector.extract_strided_slice %449 {offsets = [0, 64], sizes = [8, 64], strides = [1, 1]} : vector<8x256xf32> to vector<8x64xf32>
    %453 = vector.extract_strided_slice %450 {offsets = [0, 128], sizes = [8, 64], strides = [1, 1]} : vector<8x256xf32> to vector<8x64xf32>
    %454 = vector.extract_strided_slice %449 {offsets = [0, 192], sizes = [8, 64], strides = [1, 1]} : vector<8x256xf32> to vector<8x64xf32>
    %455 = arith.mulf %452, %440 : vector<8x64xf32>
    %456 = arith.mulf %451, %453 : vector<8x64xf32>
    %457 = arith.addf %455, %456 : vector<8x64xf32>
    %458 = math.tanh %457 : vector<8x64xf32>
    %459 = arith.mulf %454, %458 : vector<8x64xf32>
    %460 = vector.extract_strided_slice %459 {offsets = [0, 0], sizes = [8, 32], strides = [1, 1]} : vector<8x64xf32> to vector<8x32xf32>
    %461 = vector.extract_strided_slice %340 {offsets = [0, 32], sizes = [8, 32], strides = [1, 1]} : vector<8x64xf32> to vector<8x32xf32>
    %462 = tpu.concatenate %460, %461 in 1 : vector<8x32xf32>, vector<8x32xf32> -> vector<8x64xf32>
    %c0_44 = arith.constant 0 : index
    %c0_45 = arith.constant 0 : index
    %463 = vector.load %arg7[%c0_44, %c0_45] : memref<64x10xf32, #tpu.memory_space<vmem>>, vector<64x10xf32>
    %cst_46 = arith.constant dense<0.000000e+00> : vector<8x10xf32>
    %464 = tpu.matmul %462, %463, %cst_46 {dimension_numbers = #tpu.dot_dimension_numbers<[1], [0], [0], [1], [0, 0, 1, 1], [], []>} : vector<8x64xf32>, vector<64x10xf32>, vector<8x10xf32> -> vector<8x10xf32>
    %c0_47 = arith.constant 0 : index
    %c0_48 = arith.constant 0 : index
    %465 = vector.load %arg8[%c0_47, %c0_48] : memref<1x10xf32, #tpu.memory_space<vmem>>, vector<1x10xf32>
    %466 = vector.broadcast %465 : vector<1x10xf32> to vector<8x10xf32>
    %467 = arith.addf %464, %466 : vector<8x10xf32>
    %c0_49 = arith.constant 0 : index
    %c0_50 = arith.constant 0 : index
    %468 = vector.load %arg9[%c0_49, %c0_50] : memref<8x10xf32, #tpu.memory_space<vmem>>, vector<8x10xf32>
    tpu.vector_store %arg9[%c0_49, %c0_50], %467 {strides = array<i32>} : memref<8x10xf32, #tpu.memory_space<vmem>>, vector<8x10xf32>,
    return
  }
}

</mosaic_0001>

<llo_original>
// kernel: tpu_custom_call.1
$region0: #{tpu_custom_call.1}
  #allocation0 [shape = 'u32[]', space=smem, size = 0x4, offset = 0x4, fixed_abs, tag = 'smem constant byte address 0x4 - core index']
  #allocation1 [shape = 'u32[144,128]{1,0:T(1,128)}', space=vmem, size = 0x12000, scoped, tag = 'internal scratch']
  %s0 = inlined_call_operand.vmem [shape: f32[64,16], index: 0, kind: input, shape index: {}]
  %s1 = inlined_call_operand.vmem [shape: f32[16,256], index: 1, kind: input, shape index: {}]
  %s2 = inlined_call_operand.vmem [shape: f32[64,256], index: 2, kind: input, shape index: {}]
  %s3 = inlined_call_operand.vmem [shape: f32[1,256], index: 3, kind: input, shape index: {}]
  %s4 = inlined_call_operand.hbm [shape: f32[64,256], index: 4, kind: input, shape index: {}]
  %s5 = inlined_call_operand.hbm [shape: f32[64,256], index: 5, kind: input, shape index: {}]
  %s6 = inlined_call_operand.vmem [shape: f32[1,256], index: 6, kind: input, shape index: {}]
  %s7 = inlined_call_operand.vmem [shape: f32[64,10], index: 7, kind: input, shape index: {}]
  %s8 = inlined_call_operand.vmem [shape: f32[1,10], index: 8, kind: input, shape index: {}]
  %s9 = inlined_call_operand.hbm [shape: f32[8,10], index: 9, kind: output, shape index: {}]
  %s10 = sld [smem:[#allocation0]]
  $region54: #{tpu_custom_call.1} parent=0
    _
  %s12 = ssub.s32 1, %s10
  %s13 = scalar_select 0, %s12, %s10
  $region1: #{tpu_custom_call.1} parent=0
    #allocation2 [shape = 'u8[65536]{0}', space=vmem, size = 0x10000, scoped, tag = 'input window, operand 4, single buffered']
    #allocation3 [shape = 's32[1]{0}', space=sflag, size = 0x4, scoped, tag = 'scoped memory for tpu_custom_call.1']
    #allocation4 [shape = 's32[1]{0}', space=sflag, size = 0x4, scoped, tag = 'scoped memory for tpu_custom_call.1']
    #allocation5 [shape = 'u8[65536]{0}', space=vmem, size = 0x10000, scoped, tag = 'input window, operand 5, single buffered']
    #allocation6 [shape = 's32[1]{0}', space=sflag, size = 0x4, scoped, tag = 'scoped memory for tpu_custom_call.1']
    #allocation7 [shape = 'u8[4096]{0}', space=vmem, size = 0x1000, scoped, tag = 'output window, operand 0, single buffered']
    %14 = vsyncpa [#allocation3], 0
    %15 = vsyncpa [#allocation6], 0
    %16 = vsyncpa [#allocation4], 0
    // Predicated region
    $region2: #{tpu_custom_call.1} parent=1 // pred_check
      _
    $region3: #{tpu_custom_call.1} parent=1 // pred_check_branch
      %18 = sbr.rel (0) target = $region5
    $region4: #{tpu_custom_call.1} parent=1 // pred_region
      _
    $region5: #{tpu_custom_call.1} parent=1 // pred_fallthru
      _
    // Predicated region
    $region6: #{tpu_custom_call.1} parent=1 // pred_check
      _
    $region7: #{tpu_custom_call.1} parent=1 // pred_check_branch
      %20 = sbr.rel (0) target = $region9
    $region8: #{tpu_custom_call.1} parent=1 // pred_region
      _
    $region9: #{tpu_custom_call.1} parent=1 // pred_fallthru
      _
    // Predicated region
    $region10: #{tpu_custom_call.1} parent=1 // pred_check
      _
    $region11: #{tpu_custom_call.1} parent=1 // pred_check_branch
      %22 = sbr.rel (0) target = $region13
    $region12: #{tpu_custom_call.1} parent=1 // pred_region
      _
    $region13: #{tpu_custom_call.1} parent=1 // pred_fallthru
      _
    // Predicated region
    $region14: #{tpu_custom_call.1} parent=1 // pred_check
      _
    $region15: #{tpu_custom_call.1} parent=1 // pred_check_branch
      %24 = sbr.rel (0) target = $region17
    $region16: #{tpu_custom_call.1} parent=1 // pred_region
      _
    $region17: #{tpu_custom_call.1} parent=1 // pred_fallthru
      _
    // Predicated region
    $region18: #{tpu_custom_call.1} parent=1 // pred_check
      _
    $region19: #{tpu_custom_call.1} parent=1 // pred_check_branch
      %26 = sbr.rel (0) target = $region21
    $region20: #{tpu_custom_call.1} parent=1 // pred_region
      %s28 = ssub.s32 2048, 2048
      %29 = vsyncadd [#allocation3], %s28
      %s30 = sshll.u32 [#allocation2], 4
      %s31 = int_to_ptr.vmem [resolvable:$true] %s30
      %36 = dma.hbm_to_vmem [thread:$0]  %s4, 2048, %s31, [#allocation3], 256, 256, 16
    $region21: #{tpu_custom_call.1} parent=1 // pred_fallthru
      _
    // Predicated region
    $region22: #{tpu_custom_call.1} parent=1 // pred_check
      _
    $region23: #{tpu_custom_call.1} parent=1 // pred_check_branch
      %38 = sbr.rel (0) target = $region25
    $region24: #{tpu_custom_call.1} parent=1 // pred_region
      %s40 = ssub.s32 2048, 2048
      %41 = vsyncadd [#allocation6], %s40
      %s42 = sshll.u32 [#allocation5], 4
      %s43 = int_to_ptr.vmem [resolvable:$true] %s42
      %48 = dma.hbm_to_vmem [thread:$0]  %s5, 2048, %s43, [#allocation6], 256, 256, 16
    $region25: #{tpu_custom_call.1} parent=1 // pred_fallthru
      _
    // Predicated region
    $region26: #{tpu_custom_call.1} parent=1 // pred_check
      _
    $region27: #{tpu_custom_call.1} parent=1 // pred_check_branch
      %50 = sbr.rel (0) target = $region29
    $region28: #{tpu_custom_call.1} parent=1 // pred_region
      _
    $region29: #{tpu_custom_call.1} parent=1 // pred_fallthru
      _
    // Predicated region
    $region30: #{tpu_custom_call.1} parent=1 // pred_check
      _
    $region31: #{tpu_custom_call.1} parent=1 // pred_check_branch
      %52 = sbr.rel (0) target = $region33
    $region32: #{tpu_custom_call.1} parent=1 // pred_region
      _
    $region33: #{tpu_custom_call.1} parent=1 // pred_fallthru
      _
    // Predicated region
    $region34: #{tpu_custom_call.1} parent=1 // pred_check
      _
    $region35: #{tpu_custom_call.1} parent=1 // pred_check_branch
      %54 = sbr.rel (0) target = $region37
    $region36: #{tpu_custom_call.1} parent=1 // pred_region
      _
    $region37: #{tpu_custom_call.1} parent=1 // pred_fallthru
      _
    // Predicated region
    $region38: #{tpu_custom_call.1} parent=1 // pred_check
      _
    $region39: #{tpu_custom_call.1} parent=1 // pred_check_branch
      %56 = sbr.rel (0) target = $region41
    $region40: #{tpu_custom_call.1} parent=1 // pred_region
      %57 = dma.done [#allocation3], 2048
    $region41: #{tpu_custom_call.1} parent=1 // pred_fallthru
      _
    // Predicated region
    $region42: #{tpu_custom_call.1} parent=1 // pred_check
      _
    $region43: #{tpu_custom_call.1} parent=1 // pred_check_branch
      %59 = sbr.rel (0) target = $region45
    $region44: #{tpu_custom_call.1} parent=1 // pred_region
      %60 = dma.done [#allocation6], 2048
    $region45: #{tpu_custom_call.1} parent=1 // pred_fallthru
      _
    %v61 = vld [vmem:[%s0] sm:$0xff]
    %v62 = vld [vmem:[%s0 + $0x8] sm:$0xff]
    %v63 = vld [vmem:[%s0 + $0x10] sm:$0xff]
    %v64 = vld [vmem:[%s0 + $0x18] sm:$0xff]
    %v65 = vld [vmem:[%s0 + $0x20] sm:$0xff]
    %v66 = vld [vmem:[%s0 + $0x28] sm:$0xff]
    %v67 = vld [vmem:[%s0 + $0x30] sm:$0xff]
    %v68 = vld [vmem:[%s0 + $0x38] sm:$0xff]
    %v69 = vld [vmem:[%s2] sm:$0xff]
    %v70 = vld [vmem:[%s2 + $0x8] sm:$0xff]
    %v71 = vld [vmem:[%s2 + $0x10] sm:$0xff]
    %v72 = vld [vmem:[%s2 + $0x18] sm:$0xff]
    %v73 = vld [vmem:[%s2 + $0x20] sm:$0xff]
    %v74 = vld [vmem:[%s2 + $0x28] sm:$0xff]
    %v75 = vld [vmem:[%s2 + $0x30] sm:$0xff]
    %v76 = vld [vmem:[%s2 + $0x38] sm:$0xff]
    %v77 = vld [vmem:[%s2 + $0x40] sm:$0xff]
    %v78 = vld [vmem:[%s2 + $0x48] sm:$0xff]
    %v79 = vld [vmem:[%s2 + $0x50] sm:$0xff]
    %v80 = vld [vmem:[%s2 + $0x58] sm:$0xff]
    %v81 = vld [vmem:[%s2 + $0x60] sm:$0xff]
    %v82 = vld [vmem:[%s2 + $0x68] sm:$0xff]
    %v83 = vld [vmem:[%s2 + $0x70] sm:$0xff]
    %v84 = vld [vmem:[%s2 + $0x78] sm:$0xff]
    %v85 = vld [vmem:[%s1] sm:$0xff]
    %v86 = vld [vmem:[%s1 + $0x8] sm:$0xff]
    %v87 = vld [vmem:[%s1 + $0x10] sm:$0xff]
    %v88 = vld [vmem:[%s1 + $0x18] sm:$0xff]
    %v89 = vld [vmem:[%s3] sm:$0x3]
    %v91 = vlaneseq
    %v92 = vshrl.u32 %v91, 7
    %v93 = vsub.s32 0, %v92
    %v94 = vrot.slane %v89, %v93
    %v95 = vlaneseq
    %v96 = vshrl.u32 %v95, 7
    %v97 = vsub.s32 1, %v96
    %v98 = vrot.slane %v89, %v97
    %vm101 = vcmask 130048
    %v103 = vsel %vm101, %v61, 0
    %v106 = vsel %vm101, %v62, 0
    %v109 = vsel %vm101, %v63, 0
    %v112 = vsel %vm101, %v64, 0
    %v115 = vsel %vm101, %v65, 0
    %v118 = vsel %vm101, %v66, 0
    %v121 = vsel %vm101, %v67, 0
    %v124 = vsel %vm101, %v68, 0
    %126 = vmatprep.subr.mxu0 0.0
    %127 = vmatpush1.msra.mxu0 0.0
    %128 = vmatprep.subr.mxu0 0.0
    %129 = vmatpush1.msra.mxu0 0.0
    %130 = vmatprep.subr.mxu0 0.0
    %131 = vmatpush1.msra.mxu0 0.0
    %132 = vmatprep.subr.mxu0 0.0
    %133 = vmatpush1.msra.mxu0 0.0
    %134 = vmatprep.subr.mxu0 0.0
    %135 = vmatpush1.msra.mxu0 0.0
    %136 = vmatprep.subr.mxu0 0.0
    %137 = vmatpush1.msra.mxu0 0.0
    %138 = vmatprep.subr.mxu0 0.0
    %139 = vmatpush1.msra.mxu0 0.0
    %140 = vmatprep.subr.mxu0 0.0
    %141 = vmatpush1.msra.mxu0 0.0
    %142 = vmatprep.subr.mxu0 0.0
    %143 = vmatpush1.msra.mxu0 0.0
    %144 = vmatprep.subr.mxu0 0.0
    %145 = vmatpush1.msra.mxu0 0.0
    %146 = vmatprep.subr.mxu0 0.0
    %147 = vmatpush1.msra.mxu0 0.0
    %148 = vmatprep.subr.mxu0 0.0
    %149 = vmatpush1.msra.mxu0 0.0
    %150 = vmatprep.subr.mxu0 0.0
    %151 = vmatpush1.msra.mxu0 0.0
    %152 = vmatprep.subr.mxu0 0.0
    %153 = vmatpush1.msra.mxu0 0.0
    %154 = vmatprep.subr.mxu0 %v88
    %155 = vmatpush1.msra.mxu0 %v87
    %156 = vmatprep.subr.mxu0 %v86
    %157 = vmatpush1.msra.mxu0 %v85
    %158 = vmatprep.subr.mxu0 0.0
    %159 = vmatpush2.msra.mxu0 0.0
    %160 = vmatprep.subr.mxu0 0.0
    %161 = vmatpush2.msra.mxu0 0.0
    %162 = vmatprep.subr.mxu0 0.0
    %163 = vmatpush2.msra.mxu0 0.0
    %164 = vmatprep.subr.mxu0 0.0
    %165 = vmatpush2.msra.mxu0 0.0
    %166 = vmatprep.subr.mxu0 0.0
    %167 = vmatpush2.msra.mxu0 0.0
    %168 = vmatprep.subr.mxu0 0.0
    %169 = vmatpush2.msra.mxu0 0.0
    %170 = vmatprep.subr.mxu0 0.0
    %171 = vmatpush2.msra.mxu0 0.0
    %172 = vmatprep.subr.mxu0 0.0
    %173 = vmatpush2.msra.mxu0 0.0
    %174 = vmatprep.subr.mxu0 0.0
    %175 = vmatpush2.msra.mxu0 0.0
    %176 = vmatprep.subr.mxu0 0.0
    %177 = vmatpush2.msra.mxu0 0.0
    %178 = vmatprep.subr.mxu0 0.0
    %179 = vmatpush2.msra.mxu0 0.0
    %180 = vmatprep.subr.mxu0 0.0
    %181 = vmatpush2.msra.mxu0 0.0
    %182 = vmatprep.subr.mxu0 0.0
    %183 = vmatpush2.msra.mxu0 0.0
    %184 = vmatprep.subr.mxu0 0.0
    %185 = vmatpush2.msra.mxu0 0.0
    %186 = vmatprep.subr.mxu0 0.0
    %187 = vmatpush2.msra.mxu0 0.0
    %188 = vmatprep.subr.mxu0 0.0
    %189 = vmatpush2.msra.mxu0 0.0
    %190 = vmatprep.mubr.f32.mxu0 0.0
    %191 = vmatmul.mubr.f32.gmra.mxu0 %v103
    %v192 = vpop.f32.mrf.mxu0
    %v193 = vadd.f32 %v94, %v192
    %v194 = vpop.f32.mrf.mxu0
    %v195 = vadd.f32 %v98, %v194
    %196 = vmatprep.mubr.f32.mxu0 0.0
    %197 = vmatmul.mubr.f32.gmra.mxu0 %v106
    %v198 = vpop.f32.mrf.mxu0
    %v199 = vadd.f32 %v94, %v198
    %v200 = vpop.f32.mrf.mxu0
    %v201 = vadd.f32 %v98, %v200
    %202 = vmatprep.mubr.f32.mxu0 0.0
    %203 = vmatmul.mubr.f32.gmra.mxu0 %v109
    %v204 = vpop.f32.mrf.mxu0
    %v205 = vadd.f32 %v94, %v204
    %v206 = vpop.f32.mrf.mxu0
    %v207 = vadd.f32 %v98, %v206
    %208 = vmatprep.mubr.f32.mxu0 0.0
    %209 = vmatmul.mubr.f32.gmra.mxu0 %v112
    %v210 = vpop.f32.mrf.mxu0
    %v211 = vadd.f32 %v94, %v210
    %v212 = vpop.f32.mrf.mxu0
    %v213 = vadd.f32 %v98, %v212
    %214 = vmatprep.mubr.f32.mxu0 0.0
    %215 = vmatmul.mubr.f32.gmra.mxu0 %v115
    %v216 = vpop.f32.mrf.mxu0
    %v217 = vadd.f32 %v94, %v216
    %v218 = vpop.f32.mrf.mxu0
    %v219 = vadd.f32 %v98, %v218
    %220 = vmatprep.mubr.f32.mxu0 0.0
    %221 = vmatmul.mubr.f32.gmra.mxu0 %v118
    %v222 = vpop.f32.mrf.mxu0
    %v223 = vadd.f32 %v94, %v222
    %v224 = vpop.f32.mrf.mxu0
    %v225 = vadd.f32 %v98, %v224
    %226 = vmatprep.mubr.f32.mxu0 0.0
    %227 = vmatmul.mubr.f32.gmra.mxu0 %v121
    %v228 = vpop.f32.mrf.mxu0
    %v229 = vadd.f32 %v94, %v228
    %v230 = vpop.f32.mrf.mxu0
    %v231 = vadd.f32 %v98, %v230
    %232 = vmatprep.mubr.f32.mxu0 0.0
    %233 = vmatmul.mubr.f32.gmra.mxu0 %v124
    %v234 = vpop.f32.mrf.mxu0
    %v235 = vadd.f32 %v94, %v234
    %v236 = vpop.f32.mrf.mxu0
    %v237 = vadd.f32 %v98, %v236
    %238 = vdwg.mxu0
    %vm239 = vcmask 261120
    %v240 = vsel %vm239, %v193, %v235
    %vm241 = vcmask 523264
    %v242 = vsel %vm241, %v240, %v193
    %vm243 = vcmask 785408
    %v244 = vsel %vm243, %v242, %v235
    %v245 = vsel %vm239, %v195, %v237
    %v246 = vsel %vm241, %v245, %v195
    %v247 = vsel %vm243, %v246, %v237
    %v248 = vsel %vm239, %v199, %v229
    %v249 = vsel %vm241, %v248, %v199
    %v250 = vsel %vm243, %v249, %v229
    %v251 = vsel %vm239, %v201, %v231
    %v252 = vsel %vm241, %v251, %v201
    %v253 = vsel %vm243, %v252, %v231
    %v254 = vsel %vm239, %v205, %v223
    %v255 = vsel %vm241, %v254, %v205
    %v256 = vsel %vm243, %v255, %v223
    %v257 = vsel %vm239, %v207, %v225
    %v258 = vsel %vm241, %v257, %v207
    %v259 = vsel %vm243, %v258, %v225
    %v260 = vsel %vm239, %v211, %v217
    %v261 = vsel %vm241, %v260, %v211
    %v262 = vsel %vm243, %v261, %v217
    %v263 = vsel %vm239, %v213, %v219
    %v264 = vsel %vm241, %v263, %v213
    %v265 = vsel %vm243, %v264, %v219
    %v266 = vsel %vm239, %v217, %v211
    %v267 = vsel %vm241, %v266, %v217
    %v268 = vsel %vm243, %v267, %v211
    %v269 = vsel %vm239, %v219, %v213
    %v270 = vsel %vm241, %v269, %v219
    %v271 = vsel %vm243, %v270, %v213
    %v272 = vsel %vm239, %v223, %v205
    %v273 = vsel %vm241, %v272, %v223
    %v274 = vsel %vm243, %v273, %v205
    %v275 = vsel %vm239, %v225, %v207
    %v276 = vsel %vm241, %v275, %v225
    %v277 = vsel %vm243, %v276, %v207
    %v278 = vsel %vm239, %v229, %v199
    %v279 = vsel %vm241, %v278, %v229
    %v280 = vsel %vm243, %v279, %v199
    %v281 = vsel %vm239, %v231, %v201
    %v282 = vsel %vm241, %v281, %v231
    %v283 = vsel %vm243, %v282, %v201
    %v284 = vsel %vm239, %v235, %v193
    %v285 = vsel %vm241, %v284, %v235
    %v286 = vsel %vm243, %v285, %v193
    %v287 = vsel %vm239, %v237, %v195
    %v288 = vsel %vm241, %v287, %v237
    %v289 = vsel %vm243, %v288, %v195
    %v290 = vxor.u32 %v244, 2147483648
    %v291 = vxor.u32 %v247, 2147483648
    %v292 = vmul.f32 %v290, 1.442695
    %v293 = vpow.pop %v292
    %v294 = vmul.f32 %v291, 1.442695
    %v295 = vpow.pop %v294
    %v296 = vadd.f32 %v293, 1.0
    %v297 = vadd.f32 %v295, 1.0
    %v298 = vrcp.pop %v296
    %v299 = vmul.f32 1.0, %v298
    %v300 = vrcp.pop %v297
    %v301 = vmul.f32 1.0, %v300
    %v302 = vtanh.pop %v247
    %v303 = vmul.f32 %v299, %v302
    %v304 = vtanh.pop %v303
    %306 = vrot.lane.b32.xlu0 %v304, 64
    %v307 = vpop.permute.xlu0 %306
    %v309 = vmul.f32 %v301, %v307
    %311 = vrot.lane.b32.xlu0 %v309, 64
    %v312 = vpop.permute.xlu0 %311
    %v313 = vsel %vm241, %v312, 0
    %315 = vmatprep.subr.mxu0 0.0
    %316 = vmatpush1.msra.mxu0 0.0
    %317 = vmatprep.subr.mxu0 0.0
    %318 = vmatpush1.msra.mxu0 0.0
    %319 = vmatprep.subr.mxu0 0.0
    %320 = vmatpush1.msra.mxu0 0.0
    %321 = vmatprep.subr.mxu0 0.0
    %322 = vmatpush1.msra.mxu0 0.0
    %323 = vmatprep.subr.mxu0 0.0
    %324 = vmatpush1.msra.mxu0 0.0
    %325 = vmatprep.subr.mxu0 0.0
    %326 = vmatpush1.msra.mxu0 0.0
    %327 = vmatprep.subr.mxu0 0.0
    %328 = vmatpush1.msra.mxu0 0.0
    %329 = vmatprep.subr.mxu0 0.0
    %330 = vmatpush1.msra.mxu0 0.0
    %331 = vmatprep.subr.mxu0 %v84
    %332 = vmatpush1.msra.mxu0 %v83
    %333 = vmatprep.subr.mxu0 %v82
    %334 = vmatpush1.msra.mxu0 %v81
    %335 = vmatprep.subr.mxu0 %v80
    %336 = vmatpush1.msra.mxu0 %v79
    %337 = vmatprep.subr.mxu0 %v78
    %338 = vmatpush1.msra.mxu0 %v77
    %339 = vmatprep.subr.mxu0 %v76
    %340 = vmatpush1.msra.mxu0 %v75
    %341 = vmatprep.subr.mxu0 %v74
    %342 = vmatpush1.msra.mxu0 %v73
    %343 = vmatprep.subr.mxu0 %v72
    %344 = vmatpush1.msra.mxu0 %v71
    %345 = vmatprep.subr.mxu0 %v70
    %346 = vmatpush1.msra.mxu0 %v69
    %347 = vmatprep.subr.mxu0 0.0
    %348 = vmatpush2.msra.mxu0 0.0
    %349 = vmatprep.subr.mxu0 0.0
    %350 = vmatpush2.msra.mxu0 0.0
    %351 = vmatprep.subr.mxu0 0.0
    %352 = vmatpush2.msra.mxu0 0.0
    %353 = vmatprep.subr.mxu0 0.0
    %354 = vmatpush2.msra.mxu0 0.0
    %355 = vmatprep.subr.mxu0 0.0
    %356 = vmatpush2.msra.mxu0 0.0
    %357 = vmatprep.subr.mxu0 0.0
    %358 = vmatpush2.msra.mxu0 0.0
    %359 = vmatprep.subr.mxu0 0.0
    %360 = vmatpush2.msra.mxu0 0.0
    %361 = vmatprep.subr.mxu0 0.0
    %362 = vmatpush2.msra.mxu0 0.0
    %363 = vmatprep.subr.mxu0 0.0
    %364 = vmatpush2.msra.mxu0 0.0
    %365 = vmatprep.subr.mxu0 0.0
    %366 = vmatpush2.msra.mxu0 0.0
    %367 = vmatprep.subr.mxu0 0.0
    %368 = vmatpush2.msra.mxu0 0.0
    %369 = vmatprep.subr.mxu0 0.0
    %370 = vmatpush2.msra.mxu0 0.0
    %371 = vmatprep.subr.mxu0 0.0
    %372 = vmatpush2.msra.mxu0 0.0
    %373 = vmatprep.subr.mxu0 0.0
    %374 = vmatpush2.msra.mxu0 0.0
    %375 = vmatprep.subr.mxu0 0.0
    %376 = vmatpush2.msra.mxu0 0.0
    %377 = vmatprep.subr.mxu0 0.0
    %378 = vmatpush2.msra.mxu0 0.0
    %379 = vmatprep.mubr.f32.mxu0 0.0
    %380 = vmatmul.mubr.f32.gmra.mxu0 %v313
    %v381 = vpop.f32.mrf.mxu0
    %v382 = vadd.f32 0.0, %v381
    %v383 = vpop.f32.mrf.mxu0
    %v384 = vadd.f32 0.0, %v383
    %385 = vdwg.mxu0
    %v386 = vadd.f32 %v250, %v382
    %v387 = vadd.f32 %v253, %v384
    %v388 = vxor.u32 %v386, 2147483648
    %v389 = vxor.u32 %v387, 2147483648
    %v390 = vmul.f32 %v388, 1.442695
    %v391 = vpow.pop %v390
    %v392 = vmul.f32 %v389, 1.442695
    %v393 = vpow.pop %v392
    %v394 = vadd.f32 %v391, 1.0
    %v395 = vadd.f32 %v393, 1.0
    %v396 = vrcp.pop %v394
    %v397 = vmul.f32 1.0, %v396
    %v398 = vrcp.pop %v395
    %v399 = vmul.f32 1.0, %v398
    %v400 = vtanh.pop %v387
    %402 = vrot.lane.b32.xlu0 %v303, 64
    %v403 = vpop.permute.xlu0 %402
    %v405 = vmul.f32 %v397, %v403
    %v406 = vmul.f32 %v397, %v400
    %408 = vrot.lane.b32.xlu0 %v406, 64
    %v409 = vpop.permute.xlu0 %408
    %v411 = vadd.f32 %v405, %v409
    %v412 = vtanh.pop %v411
    %v413 = vmul.f32 %v399, %v412
    %415 = vrot.lane.b32.xlu0 %v413, 64
    %v416 = vpop.permute.xlu0 %415
    %v417 = vsel %vm241, %v416, 0
    %419 = vmatprep.subr.mxu0 0.0
    %420 = vmatpush1.msra.mxu0 0.0
    %421 = vmatprep.subr.mxu0 0.0
    %422 = vmatpush1.msra.mxu0 0.0
    %423 = vmatprep.subr.mxu0 0.0
    %424 = vmatpush1.msra.mxu0 0.0
    %425 = vmatprep.subr.mxu0 0.0
    %426 = vmatpush1.msra.mxu0 0.0
    %427 = vmatprep.subr.mxu0 0.0
    %428 = vmatpush1.msra.mxu0 0.0
    %429 = vmatprep.subr.mxu0 0.0
    %430 = vmatpush1.msra.mxu0 0.0
    %431 = vmatprep.subr.mxu0 0.0
    %432 = vmatpush1.msra.mxu0 0.0
    %433 = vmatprep.subr.mxu0 0.0
    %434 = vmatpush1.msra.mxu0 0.0
    %435 = vmatprep.subr.mxu0 %v84
    %436 = vmatpush1.msra.mxu0 %v83
    %437 = vmatprep.subr.mxu0 %v82
    %438 = vmatpush1.msra.mxu0 %v81
    %439 = vmatprep.subr.mxu0 %v80
    %440 = vmatpush1.msra.mxu0 %v79
    %441 = vmatprep.subr.mxu0 %v78
    %442 = vmatpush1.msra.mxu0 %v77
    %443 = vmatprep.subr.mxu0 %v76
    %444 = vmatpush1.msra.mxu0 %v75
    %445 = vmatprep.subr.mxu0 %v74
    %446 = vmatpush1.msra.mxu0 %v73
    %447 = vmatprep.subr.mxu0 %v72
    %448 = vmatpush1.msra.mxu0 %v71
    %449 = vmatprep.subr.mxu0 %v70
    %450 = vmatpush1.msra.mxu0 %v69
    %451 = vmatprep.subr.mxu0 0.0
    %452 = vmatpush2.msra.mxu0 0.0
    %453 = vmatprep.subr.mxu0 0.0
    %454 = vmatpush2.msra.mxu0 0.0
    %455 = vmatprep.subr.mxu0 0.0
    %456 = vmatpush2.msra.mxu0 0.0
    %457 = vmatprep.subr.mxu0 0.0
    %458 = vmatpush2.msra.mxu0 0.0
    %459 = vmatprep.subr.mxu0 0.0
    %460 = vmatpush2.msra.mxu0 0.0
    %461 = vmatprep.subr.mxu0 0.0
    %462 = vmatpush2.msra.mxu0 0.0
    %463 = vmatprep.subr.mxu0 0.0
    %464 = vmatpush2.msra.mxu0 0.0
    %465 = vmatprep.subr.mxu0 0.0
    %466 = vmatpush2.msra.mxu0 0.0
    %467 = vmatprep.subr.mxu0 0.0
    %468 = vmatpush2.msra.mxu0 0.0
    %469 = vmatprep.subr.mxu0 0.0
    %470 = vmatpush2.msra.mxu0 0.0
    %471 = vmatprep.subr.mxu0 0.0
    %472 = vmatpush2.msra.mxu0 0.0
    %473 = vmatprep.subr.mxu0 0.0
    %474 = vmatpush2.msra.mxu0 0.0
    %475 = vmatprep.subr.mxu0 0.0
    %476 = vmatpush2.msra.mxu0 0.0
    %477 = vmatprep.subr.mxu0 0.0
    %478 = vmatpush2.msra.mxu0 0.0
    %479 = vmatprep.subr.mxu0 0.0
    %480 = vmatpush2.msra.mxu0 0.0
    %481 = vmatprep.subr.mxu0 0.0
    %482 = vmatpush2.msra.mxu0 0.0
    %483 = vmatprep.mubr.f32.mxu0 0.0
    %484 = vmatmul.mubr.f32.gmra.mxu0 %v417
    %v485 = vpop.f32.mrf.mxu0
    %v486 = vadd.f32 0.0, %v485
    %v487 = vpop.f32.mrf.mxu0
    %v488 = vadd.f32 0.0, %v487
    %489 = vdwg.mxu0
    %v490 = vadd.f32 %v256, %v486
    %v491 = vadd.f32 %v259, %v488
    %v492 = vxor.u32 %v490, 2147483648
    %v493 = vxor.u32 %v491, 2147483648
    %v494 = vmul.f32 %v492, 1.442695
    %v495 = vpow.pop %v494
    %v496 = vmul.f32 %v493, 1.442695
    %v497 = vpow.pop %v496
    %v498 = vadd.f32 %v495, 1.0
    %v499 = vadd.f32 %v497, 1.0
    %v500 = vrcp.pop %v498
    %v501 = vmul.f32 1.0, %v500
    %v502 = vrcp.pop %v499
    %v503 = vmul.f32 1.0, %v502
    %v504 = vtanh.pop %v491
    %v505 = vmul.f32 %v501, %v411
    %v506 = vmul.f32 %v501, %v504
    %508 = vrot.lane.b32.xlu0 %v506, 64
    %v509 = vpop.permute.xlu0 %508
    %v511 = vadd.f32 %v505, %v509
    %v512 = vtanh.pop %v511
    %v513 = vmul.f32 %v503, %v512
    %515 = vrot.lane.b32.xlu0 %v513, 64
    %v516 = vpop.permute.xlu0 %515
    %v517 = vsel %vm241, %v516, 0
    %519 = vmatprep.subr.mxu0 0.0
    %520 = vmatpush1.msra.mxu0 0.0
    %521 = vmatprep.subr.mxu0 0.0
    %522 = vmatpush1.msra.mxu0 0.0
    %523 = vmatprep.subr.mxu0 0.0
    %524 = vmatpush1.msra.mxu0 0.0
    %525 = vmatprep.subr.mxu0 0.0
    %526 = vmatpush1.msra.mxu0 0.0
    %527 = vmatprep.subr.mxu0 0.0
    %528 = vmatpush1.msra.mxu0 0.0
    %529 = vmatprep.subr.mxu0 0.0
    %530 = vmatpush1.msra.mxu0 0.0
    %531 = vmatprep.subr.mxu0 0.0
    %532 = vmatpush1.msra.mxu0 0.0
    %533 = vmatprep.subr.mxu0 0.0
    %534 = vmatpush1.msra.mxu0 0.0
    %535 = vmatprep.subr.mxu0 %v84
    %536 = vmatpush1.msra.mxu0 %v83
    %537 = vmatprep.subr.mxu0 %v82
    %538 = vmatpush1.msra.mxu0 %v81
    %539 = vmatprep.subr.mxu0 %v80
    %540 = vmatpush1.msra.mxu0 %v79
    %541 = vmatprep.subr.mxu0 %v78
    %542 = vmatpush1.msra.mxu0 %v77
    %543 = vmatprep.subr.mxu0 %v76
    %544 = vmatpush1.msra.mxu0 %v75
    %545 = vmatprep.subr.mxu0 %v74
    %546 = vmatpush1.msra.mxu0 %v73
    %547 = vmatprep.subr.mxu0 %v72
    %548 = vmatpush1.msra.mxu0 %v71
    %549 = vmatprep.subr.mxu0 %v70
    %550 = vmatpush1.msra.mxu0 %v69
    %551 = vmatprep.subr.mxu0 0.0
    %552 = vmatpush2.msra.mxu0 0.0
    %553 = vmatprep.subr.mxu0 0.0
    %554 = vmatpush2.msra.mxu0 0.0
    %555 = vmatprep.subr.mxu0 0.0
    %556 = vmatpush2.msra.mxu0 0.0
    %557 = vmatprep.subr.mxu0 0.0
    %558 = vmatpush2.msra.mxu0 0.0
    %559 = vmatprep.subr.mxu0 0.0
    %560 = vmatpush2.msra.mxu0 0.0
    %561 = vmatprep.subr.mxu0 0.0
    %562 = vmatpush2.msra.mxu0 0.0
    %563 = vmatprep.subr.mxu0 0.0
    %564 = vmatpush2.msra.mxu0 0.0
    %565 = vmatprep.subr.mxu0 0.0
    %566 = vmatpush2.msra.mxu0 0.0
    %567 = vmatprep.subr.mxu0 0.0
    %568 = vmatpush2.msra.mxu0 0.0
    %569 = vmatprep.subr.mxu0 0.0
    %570 = vmatpush2.msra.mxu0 0.0
    %571 = vmatprep.subr.mxu0 0.0
    %572 = vmatpush2.msra.mxu0 0.0
    %573 = vmatprep.subr.mxu0 0.0
    %574 = vmatpush2.msra.mxu0 0.0
    %575 = vmatprep.subr.mxu0 0.0
    %576 = vmatpush2.msra.mxu0 0.0
    %577 = vmatprep.subr.mxu0 0.0
    %578 = vmatpush2.msra.mxu0 0.0
    %579 = vmatprep.subr.mxu0 0.0
    %580 = vmatpush2.msra.mxu0 0.0
    %581 = vmatprep.subr.mxu0 0.0
    %582 = vmatpush2.msra.mxu0 0.0
    %583 = vmatprep.mubr.f32.mxu0 0.0
    %584 = vmatmul.mubr.f32.gmra.mxu0 %v517
    %v585 = vpop.f32.mrf.mxu0
    %v586 = vadd.f32 0.0, %v585
    %v587 = vpop.f32.mrf.mxu0
    %v588 = vadd.f32 0.0, %v587
    %589 = vdwg.mxu0
    %v590 = vadd.f32 %v262, %v586
    %v591 = vadd.f32 %v265, %v588
    %v592 = vxor.u32 %v590, 2147483648
    %v593 = vxor.u32 %v591, 2147483648
    %v594 = vmul.f32 %v592, 1.442695
    %v595 = vpow.pop %v594
    %v596 = vmul.f32 %v593, 1.442695
    %v597 = vpow.pop %v596
    %v598 = vadd.f32 %v595, 1.0
    %v599 = vadd.f32 %v597, 1.0
    %v600 = vrcp.pop %v598
    %v601 = vmul.f32 1.0, %v600
    %v602 = vrcp.pop %v599
    %v603 = vmul.f32 1.0, %v602
    %v604 = vtanh.pop %v591
    %v605 = vmul.f32 %v601, %v511
    %v606 = vmul.f32 %v601, %v604
    %608 = vrot.lane.b32.xlu0 %v606, 64
    %v609 = vpop.permute.xlu0 %608
    %v611 = vadd.f32 %v605, %v609
    %v612 = vtanh.pop %v611
    %v613 = vmul.f32 %v603, %v612
    %615 = vrot.lane.b32.xlu0 %v613, 64
    %v616 = vpop.permute.xlu0 %615
    %v617 = vsel %vm241, %v616, 0
    %619 = vmatprep.subr.mxu0 0.0
    %620 = vmatpush1.msra.mxu0 0.0
    %621 = vmatprep.subr.mxu0 0.0
    %622 = vmatpush1.msra.mxu0 0.0
    %623 = vmatprep.subr.mxu0 0.0
    %624 = vmatpush1.msra.mxu0 0.0
    %625 = vmatprep.subr.mxu0 0.0
    %626 = vmatpush1.msra.mxu0 0.0
    %627 = vmatprep.subr.mxu0 0.0
    %628 = vmatpush1.msra.mxu0 0.0
    %629 = vmatprep.subr.mxu0 0.0
    %630 = vmatpush1.msra.mxu0 0.0
    %631 = vmatprep.subr.mxu0 0.0
    %632 = vmatpush1.msra.mxu0 0.0
    %633 = vmatprep.subr.mxu0 0.0
    %634 = vmatpush1.msra.mxu0 0.0
    %635 = vmatprep.subr.mxu0 %v84
    %636 = vmatpush1.msra.mxu0 %v83
    %637 = vmatprep.subr.mxu0 %v82
    %638 = vmatpush1.msra.mxu0 %v81
    %639 = vmatprep.subr.mxu0 %v80
    %640 = vmatpush1.msra.mxu0 %v79
    %641 = vmatprep.subr.mxu0 %v78
    %642 = vmatpush1.msra.mxu0 %v77
    %643 = vmatprep.subr.mxu0 %v76
    %644 = vmatpush1.msra.mxu0 %v75
    %645 = vmatprep.subr.mxu0 %v74
    %646 = vmatpush1.msra.mxu0 %v73
    %647 = vmatprep.subr.mxu0 %v72
    %648 = vmatpush1.msra.mxu0 %v71
    %649 = vmatprep.subr.mxu0 %v70
    %650 = vmatpush1.msra.mxu0 %v69
    %651 = vmatprep.subr.mxu0 0.0
    %652 = vmatpush2.msra.mxu0 0.0
    %653 = vmatprep.subr.mxu0 0.0
    %654 = vmatpush2.msra.mxu0 0.0
    %655 = vmatprep.subr.mxu0 0.0
    %656 = vmatpush2.msra.mxu0 0.0
    %657 = vmatprep.subr.mxu0 0.0
    %658 = vmatpush2.msra.mxu0 0.0
    %659 = vmatprep.subr.mxu0 0.0
    %660 = vmatpush2.msra.mxu0 0.0
    %661 = vmatprep.subr.mxu0 0.0
    %662 = vmatpush2.msra.mxu0 0.0
    %663 = vmatprep.subr.mxu0 0.0
    %664 = vmatpush2.msra.mxu0 0.0
    %665 = vmatprep.subr.mxu0 0.0
    %666 = vmatpush2.msra.mxu0 0.0
    %667 = vmatprep.subr.mxu0 0.0
    %668 = vmatpush2.msra.mxu0 0.0
    %669 = vmatprep.subr.mxu0 0.0
    %670 = vmatpush2.msra.mxu0 0.0
    %671 = vmatprep.subr.mxu0 0.0
    %672 = vmatpush2.msra.mxu0 0.0
    %673 = vmatprep.subr.mxu0 0.0
    %674 = vmatpush2.msra.mxu0 0.0
    %675 = vmatprep.subr.mxu0 0.0
    %676 = vmatpush2.msra.mxu0 0.0
    %677 = vmatprep.subr.mxu0 0.0
    %678 = vmatpush2.msra.mxu0 0.0
    %679 = vmatprep.subr.mxu0 0.0
    %680 = vmatpush2.msra.mxu0 0.0
    %681 = vmatprep.subr.mxu0 0.0
    %682 = vmatpush2.msra.mxu0 0.0
    %683 = vmatprep.mubr.f32.mxu0 0.0
    %684 = vmatmul.mubr.f32.gmra.mxu0 %v617
    %v685 = vpop.f32.mrf.mxu0
    %v686 = vadd.f32 0.0, %v685
    %v687 = vpop.f32.mrf.mxu0
    %v688 = vadd.f32 0.0, %v687
    %689 = vdwg.mxu0
    %v690 = vadd.f32 %v268, %v686
    %v691 = vadd.f32 %v271, %v688
    %v692 = vxor.u32 %v690, 2147483648
    %v693 = vxor.u32 %v691, 2147483648
    %v694 = vmul.f32 %v692, 1.442695
    %v695 = vpow.pop %v694
    %v696 = vmul.f32 %v693, 1.442695
    %v697 = vpow.pop %v696
    %v698 = vadd.f32 %v695, 1.0
    %v699 = vadd.f32 %v697, 1.0
    %v700 = vrcp.pop %v698
    %v701 = vmul.f32 1.0, %v700
    %v702 = vrcp.pop %v699
    %v703 = vmul.f32 1.0, %v702
    %v704 = vtanh.pop %v691
    %v705 = vmul.f32 %v701, %v611
    %v706 = vmul.f32 %v701, %v704
    %708 = vrot.lane.b32.xlu0 %v706, 64
    %v709 = vpop.permute.xlu0 %708
    %v711 = vadd.f32 %v705, %v709
    %v712 = vtanh.pop %v711
    %v713 = vmul.f32 %v703, %v712
    %715 = vrot.lane.b32.xlu0 %v713, 64
    %v716 = vpop.permute.xlu0 %715
    %v717 = vsel %vm241, %v716, 0
    %719 = vmatprep.subr.mxu0 0.0
    %720 = vmatpush1.msra.mxu0 0.0
    %721 = vmatprep.subr.mxu0 0.0
    %722 = vmatpush1.msra.mxu0 0.0
    %723 = vmatprep.subr.mxu0 0.0
    %724 = vmatpush1.msra.mxu0 0.0
    %725 = vmatprep.subr.mxu0 0.0
    %726 = vmatpush1.msra.mxu0 0.0
    %727 = vmatprep.subr.mxu0 0.0
    %728 = vmatpush1.msra.mxu0 0.0
    %729 = vmatprep.subr.mxu0 0.0
    %730 = vmatpush1.msra.mxu0 0.0
    %731 = vmatprep.subr.mxu0 0.0
    %732 = vmatpush1.msra.mxu0 0.0
    %733 = vmatprep.subr.mxu0 0.0
    %734 = vmatpush1.msra.mxu0 0.0
    %735 = vmatprep.subr.mxu0 %v84
    %736 = vmatpush1.msra.mxu0 %v83
    %737 = vmatprep.subr.mxu0 %v82
    %738 = vmatpush1.msra.mxu0 %v81
    %739 = vmatprep.subr.mxu0 %v80
    %740 = vmatpush1.msra.mxu0 %v79
    %741 = vmatprep.subr.mxu0 %v78
    %742 = vmatpush1.msra.mxu0 %v77
    %743 = vmatprep.subr.mxu0 %v76
    %744 = vmatpush1.msra.mxu0 %v75
    %745 = vmatprep.subr.mxu0 %v74
    %746 = vmatpush1.msra.mxu0 %v73
    %747 = vmatprep.subr.mxu0 %v72
    %748 = vmatpush1.msra.mxu0 %v71
    %749 = vmatprep.subr.mxu0 %v70
    %750 = vmatpush1.msra.mxu0 %v69
    %751 = vmatprep.subr.mxu0 0.0
    %752 = vmatpush2.msra.mxu0 0.0
    %753 = vmatprep.subr.mxu0 0.0
    %754 = vmatpush2.msra.mxu0 0.0
    %755 = vmatprep.subr.mxu0 0.0
    %756 = vmatpush2.msra.mxu0 0.0
    %757 = vmatprep.subr.mxu0 0.0
    %758 = vmatpush2.msra.mxu0 0.0
    %759 = vmatprep.subr.mxu0 0.0
    %760 = vmatpush2.msra.mxu0 0.0
    %761 = vmatprep.subr.mxu0 0.0
    %762 = vmatpush2.msra.mxu0 0.0
    %763 = vmatprep.subr.mxu0 0.0
    %764 = vmatpush2.msra.mxu0 0.0
    %765 = vmatprep.subr.mxu0 0.0
    %766 = vmatpush2.msra.mxu0 0.0
    %767 = vmatprep.subr.mxu0 0.0
    %768 = vmatpush2.msra.mxu0 0.0
    %769 = vmatprep.subr.mxu0 0.0
    %770 = vmatpush2.msra.mxu0 0.0
    %771 = vmatprep.subr.mxu0 0.0
    %772 = vmatpush2.msra.mxu0 0.0
    %773 = vmatprep.subr.mxu0 0.0
    %774 = vmatpush2.msra.mxu0 0.0
    %775 = vmatprep.subr.mxu0 0.0
    %776 = vmatpush2.msra.mxu0 0.0
    %777 = vmatprep.subr.mxu0 0.0
    %778 = vmatpush2.msra.mxu0 0.0
    %779 = vmatprep.subr.mxu0 0.0
    %780 = vmatpush2.msra.mxu0 0.0
    %781 = vmatprep.subr.mxu0 0.0
    %782 = vmatpush2.msra.mxu0 0.0
    %783 = vmatprep.mubr.f32.mxu0 0.0
    %784 = vmatmul.mubr.f32.gmra.mxu0 %v717
    %v785 = vpop.f32.mrf.mxu0
    %v786 = vadd.f32 0.0, %v785
    %v787 = vpop.f32.mrf.mxu0
    %v788 = vadd.f32 0.0, %v787
    %789 = vdwg.mxu0
    %v790 = vadd.f32 %v274, %v786
    %v791 = vadd.f32 %v277, %v788
    %v792 = vxor.u32 %v790, 2147483648
    %v793 = vxor.u32 %v791, 2147483648
    %v794 = vmul.f32 %v792, 1.442695
    %v795 = vpow.pop %v794
    %v796 = vmul.f32 %v793, 1.442695
    %v797 = vpow.pop %v796
    %v798 = vadd.f32 %v795, 1.0
    %v799 = vadd.f32 %v797, 1.0
    %v800 = vrcp.pop %v798
    %v801 = vmul.f32 1.0, %v800
    %v802 = vrcp.pop %v799
    %v803 = vmul.f32 1.0, %v802
    %v804 = vtanh.pop %v791
    %v805 = vmul.f32 %v801, %v711
    %v806 = vmul.f32 %v801, %v804
    %808 = vrot.lane.b32.xlu0 %v806, 64
    %v809 = vpop.permute.xlu0 %808
    %v811 = vadd.f32 %v805, %v809
    %v812 = vtanh.pop %v811
    %v813 = vmul.f32 %v803, %v812
    %815 = vrot.lane.b32.xlu0 %v813, 64
    %v816 = vpop.permute.xlu0 %815
    %v817 = vsel %vm241, %v816, 0
    %819 = vmatprep.subr.mxu0 0.0
    %820 = vmatpush1.msra.mxu0 0.0
    %821 = vmatprep.subr.mxu0 0.0
    %822 = vmatpush1.msra.mxu0 0.0
    %823 = vmatprep.subr.mxu0 0.0
    %824 = vmatpush1.msra.mxu0 0.0
    %825 = vmatprep.subr.mxu0 0.0
    %826 = vmatpush1.msra.mxu0 0.0
    %827 = vmatprep.subr.mxu0 0.0
    %828 = vmatpush1.msra.mxu0 0.0
    %829 = vmatprep.subr.mxu0 0.0
    %830 = vmatpush1.msra.mxu0 0.0
    %831 = vmatprep.subr.mxu0 0.0
    %832 = vmatpush1.msra.mxu0 0.0
    %833 = vmatprep.subr.mxu0 0.0
    %834 = vmatpush1.msra.mxu0 0.0
    %835 = vmatprep.subr.mxu0 %v84
    %836 = vmatpush1.msra.mxu0 %v83
    %837 = vmatprep.subr.mxu0 %v82
    %838 = vmatpush1.msra.mxu0 %v81
    %839 = vmatprep.subr.mxu0 %v80
    %840 = vmatpush1.msra.mxu0 %v79
    %841 = vmatprep.subr.mxu0 %v78
    %842 = vmatpush1.msra.mxu0 %v77
    %843 = vmatprep.subr.mxu0 %v76
    %844 = vmatpush1.msra.mxu0 %v75
    %845 = vmatprep.subr.mxu0 %v74
    %846 = vmatpush1.msra.mxu0 %v73
    %847 = vmatprep.subr.mxu0 %v72
    %848 = vmatpush1.msra.mxu0 %v71
    %849 = vmatprep.subr.mxu0 %v70
    %850 = vmatpush1.msra.mxu0 %v69
    %851 = vmatprep.subr.mxu0 0.0
    %852 = vmatpush2.msra.mxu0 0.0
    %853 = vmatprep.subr.mxu0 0.0
    %854 = vmatpush2.msra.mxu0 0.0
    %855 = vmatprep.subr.mxu0 0.0
    %856 = vmatpush2.msra.mxu0 0.0
    %857 = vmatprep.subr.mxu0 0.0
    %858 = vmatpush2.msra.mxu0 0.0
    %859 = vmatprep.subr.mxu0 0.0
    %860 = vmatpush2.msra.mxu0 0.0
    %861 = vmatprep.subr.mxu0 0.0
    %862 = vmatpush2.msra.mxu0 0.0
    %863 = vmatprep.subr.mxu0 0.0
    %864 = vmatpush2.msra.mxu0 0.0
    %865 = vmatprep.subr.mxu0 0.0
    %866 = vmatpush2.msra.mxu0 0.0
    %867 = vmatprep.subr.mxu0 0.0
    %868 = vmatpush2.msra.mxu0 0.0
    %869 = vmatprep.subr.mxu0 0.0
    %870 = vmatpush2.msra.mxu0 0.0
    %871 = vmatprep.subr.mxu0 0.0
    %872 = vmatpush2.msra.mxu0 0.0
    %873 = vmatprep.subr.mxu0 0.0
    %874 = vmatpush2.msra.mxu0 0.0
    %875 = vmatprep.subr.mxu0 0.0
    %876 = vmatpush2.msra.mxu0 0.0
    %877 = vmatprep.subr.mxu0 0.0
    %878 = vmatpush2.msra.mxu0 0.0
    %879 = vmatprep.subr.mxu0 0.0
    %880 = vmatpush2.msra.mxu0 0.0
    %881 = vmatprep.subr.mxu0 0.0
    %882 = vmatpush2.msra.mxu0 0.0
    %883 = vmatprep.mubr.f32.mxu0 0.0
    %884 = vmatmul.mubr.f32.gmra.mxu0 %v817
    %v885 = vpop.f32.mrf.mxu0
    %v886 = vadd.f32 0.0, %v885
    %v887 = vpop.f32.mrf.mxu0
    %v888 = vadd.f32 0.0, %v887
    %889 = vdwg.mxu0
    %v890 = vadd.f32 %v280, %v886
    %v891 = vadd.f32 %v283, %v888
    %v892 = vxor.u32 %v890, 2147483648
    %v893 = vxor.u32 %v891, 2147483648
    %v894 = vmul.f32 %v892, 1.442695
    %v895 = vpow.pop %v894
    %v896 = vmul.f32 %v893, 1.442695
    %v897 = vpow.pop %v896
    %v898 = vadd.f32 %v895, 1.0
    %v899 = vadd.f32 %v897, 1.0
    %v900 = vrcp.pop %v898
    %v901 = vmul.f32 1.0, %v900
    %v902 = vrcp.pop %v899
    %v903 = vmul.f32 1.0, %v902
    %v904 = vtanh.pop %v891
    %v905 = vmul.f32 %v901, %v811
    %v906 = vmul.f32 %v901, %v904
    %908 = vrot.lane.b32.xlu0 %v906, 64
    %v909 = vpop.permute.xlu0 %908
    %v911 = vadd.f32 %v905, %v909
    %v912 = vtanh.pop %v911
    %v913 = vmul.f32 %v903, %v912
    %915 = vrot.lane.b32.xlu0 %v913, 64
    %v916 = vpop.permute.xlu0 %915
    %v917 = vsel %vm241, %v916, 0
    %919 = vmatprep.subr.mxu0 0.0
    %920 = vmatpush1.msra.mxu0 0.0
    %921 = vmatprep.subr.mxu0 0.0
    %922 = vmatpush1.msra.mxu0 0.0
    %923 = vmatprep.subr.mxu0 0.0
    %924 = vmatpush1.msra.mxu0 0.0
    %925 = vmatprep.subr.mxu0 0.0
    %926 = vmatpush1.msra.mxu0 0.0
    %927 = vmatprep.subr.mxu0 0.0
    %928 = vmatpush1.msra.mxu0 0.0
    %929 = vmatprep.subr.mxu0 0.0
    %930 = vmatpush1.msra.mxu0 0.0
    %931 = vmatprep.subr.mxu0 0.0
    %932 = vmatpush1.msra.mxu0 0.0
    %933 = vmatprep.subr.mxu0 0.0
    %934 = vmatpush1.msra.mxu0 0.0
    %935 = vmatprep.subr.mxu0 %v84
    %936 = vmatpush1.msra.mxu0 %v83
    %937 = vmatprep.subr.mxu0 %v82
    %938 = vmatpush1.msra.mxu0 %v81
    %939 = vmatprep.subr.mxu0 %v80
    %940 = vmatpush1.msra.mxu0 %v79
    %941 = vmatprep.subr.mxu0 %v78
    %942 = vmatpush1.msra.mxu0 %v77
    %943 = vmatprep.subr.mxu0 %v76
    %944 = vmatpush1.msra.mxu0 %v75
    %945 = vmatprep.subr.mxu0 %v74
    %946 = vmatpush1.msra.mxu0 %v73
    %947 = vmatprep.subr.mxu0 %v72
    %948 = vmatpush1.msra.mxu0 %v71
    %949 = vmatprep.subr.mxu0 %v70
    %950 = vmatpush1.msra.mxu0 %v69
    %951 = vmatprep.subr.mxu0 0.0
    %952 = vmatpush2.msra.mxu0 0.0
    %953 = vmatprep.subr.mxu0 0.0
    %954 = vmatpush2.msra.mxu0 0.0
    %955 = vmatprep.subr.mxu0 0.0
    %956 = vmatpush2.msra.mxu0 0.0
    %957 = vmatprep.subr.mxu0 0.0
    %958 = vmatpush2.msra.mxu0 0.0
    %959 = vmatprep.subr.mxu0 0.0
    %960 = vmatpush2.msra.mxu0 0.0
    %961 = vmatprep.subr.mxu0 0.0
    %962 = vmatpush2.msra.mxu0 0.0
    %963 = vmatprep.subr.mxu0 0.0
    %964 = vmatpush2.msra.mxu0 0.0
    %965 = vmatprep.subr.mxu0 0.0
    %966 = vmatpush2.msra.mxu0 0.0
    %967 = vmatprep.subr.mxu0 0.0
    %968 = vmatpush2.msra.mxu0 0.0
    %969 = vmatprep.subr.mxu0 0.0
    %970 = vmatpush2.msra.mxu0 0.0
    %971 = vmatprep.subr.mxu0 0.0
    %972 = vmatpush2.msra.mxu0 0.0
    %973 = vmatprep.subr.mxu0 0.0
    %974 = vmatpush2.msra.mxu0 0.0
    %975 = vmatprep.subr.mxu0 0.0
    %976 = vmatpush2.msra.mxu0 0.0
    %977 = vmatprep.subr.mxu0 0.0
    %978 = vmatpush2.msra.mxu0 0.0
    %979 = vmatprep.subr.mxu0 0.0
    %980 = vmatpush2.msra.mxu0 0.0
    %981 = vmatprep.subr.mxu0 0.0
    %982 = vmatpush2.msra.mxu0 0.0
    %983 = vmatprep.mubr.f32.mxu0 0.0
    %984 = vmatmul.mubr.f32.gmra.mxu0 %v917
    %v985 = vpop.f32.mrf.mxu0
    %v986 = vadd.f32 0.0, %v985
    %v987 = vpop.f32.mrf.mxu0
    %v988 = vadd.f32 0.0, %v987
    %989 = vdwg.mxu0
    %v990 = vadd.f32 %v286, %v986
    %v991 = vadd.f32 %v289, %v988
    %v992 = vxor.u32 %v990, 2147483648
    %v993 = vxor.u32 %v991, 2147483648
    %v994 = vmul.f32 %v992, 1.442695
    %v995 = vpow.pop %v994
    %v996 = vmul.f32 %v993, 1.442695
    %v997 = vpow.pop %v996
    %v998 = vadd.f32 %v995, 1.0
    %v999 = vadd.f32 %v997, 1.0
    %v1000 = vrcp.pop %v998
    %v1001 = vmul.f32 1.0, %v1000
    %v1002 = vrcp.pop %v999
    %v1003 = vmul.f32 1.0, %v1002
    %v1004 = vtanh.pop %v991
    %v1005 = vmul.f32 %v1001, %v911
    %v1006 = vmul.f32 %v1001, %v1004
    %1008 = vrot.lane.b32.xlu0 %v1006, 64
    %v1009 = vpop.permute.xlu0 %1008
    %v1011 = vadd.f32 %v1005, %v1009
    %v1012 = vtanh.pop %v1011
    %v1013 = vmul.f32 %v1003, %v1012
    %1016 = vrot.lane.b32.xlu0 %v1013, 64
    %v1017 = vpop.permute.xlu0 %1016
    %v1019 = vsel %vm239, %v312, %v1017
    %v1022 = vsel %vm239, %v416, %v916
    %v1025 = vsel %vm239, %v516, %v816
    %v1028 = vsel %vm239, %v616, %v716
    %v1029 = vsel %vm239, %v716, %v616
    %v1030 = vsel %vm239, %v816, %v516
    %v1031 = vsel %vm239, %v916, %v416
    %v1032 = vsel %vm239, %v1017, %v312
    %v1033 = vld [vmem:[#allocation5] sm:$0xff]
    %v1034 = vld [vmem:[#allocation5 + $0x8] sm:$0xff]
    %v1035 = vld [vmem:[#allocation5 + $0x10] sm:$0xff]
    %v1036 = vld [vmem:[#allocation5 + $0x18] sm:$0xff]
    %v1037 = vld [vmem:[#allocation5 + $0x20] sm:$0xff]
    %v1038 = vld [vmem:[#allocation5 + $0x28] sm:$0xff]
    %v1039 = vld [vmem:[#allocation5 + $0x30] sm:$0xff]
    %v1040 = vld [vmem:[#allocation5 + $0x38] sm:$0xff]
    %v1041 = vld [vmem:[#allocation5 + $0x40] sm:$0xff]
    %v1042 = vld [vmem:[#allocation5 + $0x48] sm:$0xff]
    %v1043 = vld [vmem:[#allocation5 + $0x50] sm:$0xff]
    %v1044 = vld [vmem:[#allocation5 + $0x58] sm:$0xff]
    %v1045 = vld [vmem:[#allocation5 + $0x60] sm:$0xff]
    %v1046 = vld [vmem:[#allocation5 + $0x68] sm:$0xff]
    %v1047 = vld [vmem:[#allocation5 + $0x70] sm:$0xff]
    %v1048 = vld [vmem:[#allocation5 + $0x78] sm:$0xff]
    %v1049 = vld [vmem:[#allocation2] sm:$0xff]
    %v1050 = vld [vmem:[#allocation2 + $0x8] sm:$0xff]
    %v1051 = vld [vmem:[#allocation2 + $0x10] sm:$0xff]
    %v1052 = vld [vmem:[#allocation2 + $0x18] sm:$0xff]
    %v1053 = vld [vmem:[#allocation2 + $0x20] sm:$0xff]
    %v1054 = vld [vmem:[#allocation2 + $0x28] sm:$0xff]
    %v1055 = vld [vmem:[#allocation2 + $0x30] sm:$0xff]
    %v1056 = vld [vmem:[#allocation2 + $0x38] sm:$0xff]
    %v1057 = vld [vmem:[#allocation2 + $0x40] sm:$0xff]
    %v1058 = vld [vmem:[#allocation2 + $0x48] sm:$0xff]
    %v1059 = vld [vmem:[#allocation2 + $0x50] sm:$0xff]
    %v1060 = vld [vmem:[#allocation2 + $0x58] sm:$0xff]
    %v1061 = vld [vmem:[#allocation2 + $0x60] sm:$0xff]
    %v1062 = vld [vmem:[#allocation2 + $0x68] sm:$0xff]
    %v1063 = vld [vmem:[#allocation2 + $0x70] sm:$0xff]
    %v1064 = vld [vmem:[#allocation2 + $0x78] sm:$0xff]
    %v1065 = vld [vmem:[%s6] sm:$0x3]
    %v1067 = vlaneseq
    %v1068 = vshrl.u32 %v1067, 7
    %v1069 = vsub.s32 0, %v1068
    %v1070 = vrot.slane %v1065, %v1069
    %v1071 = vlaneseq
    %v1072 = vshrl.u32 %v1071, 7
    %v1073 = vsub.s32 1, %v1072
    %v1074 = vrot.slane %v1065, %v1073
    %v1078 = vsel %vm241, %v1019, 0
    %v1081 = vsel %vm241, %v1022, 0
    %v1084 = vsel %vm241, %v1025, 0
    %v1087 = vsel %vm241, %v1028, 0
    %v1090 = vsel %vm241, %v1029, 0
    %v1093 = vsel %vm241, %v1030, 0
    %v1096 = vsel %vm241, %v1031, 0
    %v1099 = vsel %vm241, %v1032, 0
    %1101 = vmatprep.subr.mxu0 0.0
    %1102 = vmatpush1.msra.mxu0 0.0
    %1103 = vmatprep.subr.mxu0 0.0
    %1104 = vmatpush1.msra.mxu0 0.0
    %1105 = vmatprep.subr.mxu0 0.0
    %1106 = vmatpush1.msra.mxu0 0.0
    %1107 = vmatprep.subr.mxu0 0.0
    %1108 = vmatpush1.msra.mxu0 0.0
    %1109 = vmatprep.subr.mxu0 0.0
    %1110 = vmatpush1.msra.mxu0 0.0
    %1111 = vmatprep.subr.mxu0 0.0
    %1112 = vmatpush1.msra.mxu0 0.0
    %1113 = vmatprep.subr.mxu0 0.0
    %1114 = vmatpush1.msra.mxu0 0.0
    %1115 = vmatprep.subr.mxu0 0.0
    %1116 = vmatpush1.msra.mxu0 0.0
    %1117 = vmatprep.subr.mxu0 %v1064
    %1118 = vmatpush1.msra.mxu0 %v1063
    %1119 = vmatprep.subr.mxu0 %v1062
    %1120 = vmatpush1.msra.mxu0 %v1061
    %1121 = vmatprep.subr.mxu0 %v1060
    %1122 = vmatpush1.msra.mxu0 %v1059
    %1123 = vmatprep.subr.mxu0 %v1058
    %1124 = vmatpush1.msra.mxu0 %v1057
    %1125 = vmatprep.subr.mxu0 %v1056
    %1126 = vmatpush1.msra.mxu0 %v1055
    %1127 = vmatprep.subr.mxu0 %v1054
    %1128 = vmatpush1.msra.mxu0 %v1053
    %1129 = vmatprep.subr.mxu0 %v1052
    %1130 = vmatpush1.msra.mxu0 %v1051
    %1131 = vmatprep.subr.mxu0 %v1050
    %1132 = vmatpush1.msra.mxu0 %v1049
    %1133 = vmatprep.subr.mxu0 0.0
    %1134 = vmatpush2.msra.mxu0 0.0
    %1135 = vmatprep.subr.mxu0 0.0
    %1136 = vmatpush2.msra.mxu0 0.0
    %1137 = vmatprep.subr.mxu0 0.0
    %1138 = vmatpush2.msra.mxu0 0.0
    %1139 = vmatprep.subr.mxu0 0.0
    %1140 = vmatpush2.msra.mxu0 0.0
    %1141 = vmatprep.subr.mxu0 0.0
    %1142 = vmatpush2.msra.mxu0 0.0
    %1143 = vmatprep.subr.mxu0 0.0
    %1144 = vmatpush2.msra.mxu0 0.0
    %1145 = vmatprep.subr.mxu0 0.0
    %1146 = vmatpush2.msra.mxu0 0.0
    %1147 = vmatprep.subr.mxu0 0.0
    %1148 = vmatpush2.msra.mxu0 0.0
    %1149 = vmatprep.subr.mxu0 0.0
    %1150 = vmatpush2.msra.mxu0 0.0
    %1151 = vmatprep.subr.mxu0 0.0
    %1152 = vmatpush2.msra.mxu0 0.0
    %1153 = vmatprep.subr.mxu0 0.0
    %1154 = vmatpush2.msra.mxu0 0.0
    %1155 = vmatprep.subr.mxu0 0.0
    %1156 = vmatpush2.msra.mxu0 0.0
    %1157 = vmatprep.subr.mxu0 0.0
    %1158 = vmatpush2.msra.mxu0 0.0
    %1159 = vmatprep.subr.mxu0 0.0
    %1160 = vmatpush2.msra.mxu0 0.0
    %1161 = vmatprep.subr.mxu0 0.0
    %1162 = vmatpush2.msra.mxu0 0.0
    %1163 = vmatprep.subr.mxu0 0.0
    %1164 = vmatpush2.msra.mxu0 0.0
    %1165 = vmatprep.mubr.f32.mxu0 0.0
    %1166 = vmatmul.mubr.f32.gmra.mxu0 %v1078
    %v1167 = vpop.f32.mrf.mxu0
    %v1168 = vadd.f32 %v1070, %v1167
    %v1169 = vpop.f32.mrf.mxu0
    %v1170 = vadd.f32 %v1074, %v1169
    %1171 = vmatprep.mubr.f32.mxu0 0.0
    %1172 = vmatmul.mubr.f32.gmra.mxu0 %v1081
    %v1173 = vpop.f32.mrf.mxu0
    %v1174 = vadd.f32 %v1070, %v1173
    %v1175 = vpop.f32.mrf.mxu0
    %v1176 = vadd.f32 %v1074, %v1175
    %1177 = vmatprep.mubr.f32.mxu0 0.0
    %1178 = vmatmul.mubr.f32.gmra.mxu0 %v1084
    %v1179 = vpop.f32.mrf.mxu0
    %v1180 = vadd.f32 %v1070, %v1179
    %v1181 = vpop.f32.mrf.mxu0
    %v1182 = vadd.f32 %v1074, %v1181
    %1183 = vmatprep.mubr.f32.mxu0 0.0
    %1184 = vmatmul.mubr.f32.gmra.mxu0 %v1087
    %v1185 = vpop.f32.mrf.mxu0
    %v1186 = vadd.f32 %v1070, %v1185
    %v1187 = vpop.f32.mrf.mxu0
    %v1188 = vadd.f32 %v1074, %v1187
    %1189 = vmatprep.mubr.f32.mxu0 0.0
    %1190 = vmatmul.mubr.f32.gmra.mxu0 %v1090
    %v1191 = vpop.f32.mrf.mxu0
    %v1192 = vadd.f32 %v1070, %v1191
    %v1193 = vpop.f32.mrf.mxu0
    %v1194 = vadd.f32 %v1074, %v1193
    %1195 = vmatprep.mubr.f32.mxu0 0.0
    %1196 = vmatmul.mubr.f32.gmra.mxu0 %v1093
    %v1197 = vpop.f32.mrf.mxu0
    %v1198 = vadd.f32 %v1070, %v1197
    %v1199 = vpop.f32.mrf.mxu0
    %v1200 = vadd.f32 %v1074, %v1199
    %1201 = vmatprep.mubr.f32.mxu0 0.0
    %1202 = vmatmul.mubr.f32.gmra.mxu0 %v1096
    %v1203 = vpop.f32.mrf.mxu0
    %v1204 = vadd.f32 %v1070, %v1203
    %v1205 = vpop.f32.mrf.mxu0
    %v1206 = vadd.f32 %v1074, %v1205
    %1207 = vmatprep.mubr.f32.mxu0 0.0
    %1208 = vmatmul.mubr.f32.gmra.mxu0 %v1099
    %v1209 = vpop.f32.mrf.mxu0
    %v1210 = vadd.f32 %v1070, %v1209
    %v1211 = vpop.f32.mrf.mxu0
    %v1212 = vadd.f32 %v1074, %v1211
    %1213 = vdwg.mxu0
    %v1214 = vsel %vm239, %v1168, %v1210
    %v1215 = vsel %vm241, %v1214, %v1168
    %v1216 = vsel %vm243, %v1215, %v1210
    %v1217 = vsel %vm239, %v1170, %v1212
    %v1218 = vsel %vm241, %v1217, %v1170
    %v1219 = vsel %vm243, %v1218, %v1212
    %v1220 = vsel %vm239, %v1174, %v1204
    %v1221 = vsel %vm241, %v1220, %v1174
    %v1222 = vsel %vm243, %v1221, %v1204
    %v1223 = vsel %vm239, %v1176, %v1206
    %v1224 = vsel %vm241, %v1223, %v1176
    %v1225 = vsel %vm243, %v1224, %v1206
    %v1226 = vsel %vm239, %v1180, %v1198
    %v1227 = vsel %vm241, %v1226, %v1180
    %v1228 = vsel %vm243, %v1227, %v1198
    %v1229 = vsel %vm239, %v1182, %v1200
    %v1230 = vsel %vm241, %v1229, %v1182
    %v1231 = vsel %vm243, %v1230, %v1200
    %v1232 = vsel %vm239, %v1186, %v1192
    %v1233 = vsel %vm241, %v1232, %v1186
    %v1234 = vsel %vm243, %v1233, %v1192
    %v1235 = vsel %vm239, %v1188, %v1194
    %v1236 = vsel %vm241, %v1235, %v1188
    %v1237 = vsel %vm243, %v1236, %v1194
    %v1238 = vsel %vm239, %v1192, %v1186
    %v1239 = vsel %vm241, %v1238, %v1192
    %v1240 = vsel %vm243, %v1239, %v1186
    %v1241 = vsel %vm239, %v1194, %v1188
    %v1242 = vsel %vm241, %v1241, %v1194
    %v1243 = vsel %vm243, %v1242, %v1188
    %v1244 = vsel %vm239, %v1198, %v1180
    %v1245 = vsel %vm241, %v1244, %v1198
    %v1246 = vsel %vm243, %v1245, %v1180
    %v1247 = vsel %vm239, %v1200, %v1182
    %v1248 = vsel %vm241, %v1247, %v1200
    %v1249 = vsel %vm243, %v1248, %v1182
    %v1250 = vsel %vm239, %v1204, %v1174
    %v1251 = vsel %vm241, %v1250, %v1204
    %v1252 = vsel %vm243, %v1251, %v1174
    %v1253 = vsel %vm239, %v1206, %v1176
    %v1254 = vsel %vm241, %v1253, %v1206
    %v1255 = vsel %vm243, %v1254, %v1176
    %v1256 = vsel %vm239, %v1210, %v1168
    %v1257 = vsel %vm241, %v1256, %v1210
    %v1258 = vsel %vm243, %v1257, %v1168
    %v1259 = vsel %vm239, %v1212, %v1170
    %v1260 = vsel %vm241, %v1259, %v1212
    %v1261 = vsel %vm243, %v1260, %v1170
    %v1262 = vxor.u32 %v1216, 2147483648
    %v1263 = vxor.u32 %v1219, 2147483648
    %v1264 = vmul.f32 %v1262, 1.442695
    %v1265 = vpow.pop %v1264
    %v1266 = vmul.f32 %v1263, 1.442695
    %v1267 = vpow.pop %v1266
    %v1268 = vadd.f32 %v1265, 1.0
    %v1269 = vadd.f32 %v1267, 1.0
    %v1270 = vrcp.pop %v1268
    %v1271 = vmul.f32 1.0, %v1270
    %v1272 = vrcp.pop %v1269
    %v1273 = vmul.f32 1.0, %v1272
    %v1274 = vtanh.pop %v1219
    %v1275 = vmul.f32 %v1271, %v1274
    %v1276 = vtanh.pop %v1275
    %1278 = vrot.lane.b32.xlu0 %v1276, 64
    %v1279 = vpop.permute.xlu0 %1278
    %v1281 = vmul.f32 %v1273, %v1279
    %1283 = vrot.lane.b32.xlu0 %v1281, 64
    %v1284 = vpop.permute.xlu0 %1283
    %v1285 = vsel %vm241, %v1284, 0
    %1287 = vmatprep.subr.mxu0 0.0
    %1288 = vmatpush1.msra.mxu0 0.0
    %1289 = vmatprep.subr.mxu0 0.0
    %1290 = vmatpush1.msra.mxu0 0.0
    %1291 = vmatprep.subr.mxu0 0.0
    %1292 = vmatpush1.msra.mxu0 0.0
    %1293 = vmatprep.subr.mxu0 0.0
    %1294 = vmatpush1.msra.mxu0 0.0
    %1295 = vmatprep.subr.mxu0 0.0
    %1296 = vmatpush1.msra.mxu0 0.0
    %1297 = vmatprep.subr.mxu0 0.0
    %1298 = vmatpush1.msra.mxu0 0.0
    %1299 = vmatprep.subr.mxu0 0.0
    %1300 = vmatpush1.msra.mxu0 0.0
    %1301 = vmatprep.subr.mxu0 0.0
    %1302 = vmatpush1.msra.mxu0 0.0
    %1303 = vmatprep.subr.mxu0 %v1048
    %1304 = vmatpush1.msra.mxu0 %v1047
    %1305 = vmatprep.subr.mxu0 %v1046
    %1306 = vmatpush1.msra.mxu0 %v1045
    %1307 = vmatprep.subr.mxu0 %v1044
    %1308 = vmatpush1.msra.mxu0 %v1043
    %1309 = vmatprep.subr.mxu0 %v1042
    %1310 = vmatpush1.msra.mxu0 %v1041
    %1311 = vmatprep.subr.mxu0 %v1040
    %1312 = vmatpush1.msra.mxu0 %v1039
    %1313 = vmatprep.subr.mxu0 %v1038
    %1314 = vmatpush1.msra.mxu0 %v1037
    %1315 = vmatprep.subr.mxu0 %v1036
    %1316 = vmatpush1.msra.mxu0 %v1035
    %1317 = vmatprep.subr.mxu0 %v1034
    %1318 = vmatpush1.msra.mxu0 %v1033
    %1319 = vmatprep.subr.mxu0 0.0
    %1320 = vmatpush2.msra.mxu0 0.0
    %1321 = vmatprep.subr.mxu0 0.0
    %1322 = vmatpush2.msra.mxu0 0.0
    %1323 = vmatprep.subr.mxu0 0.0
    %1324 = vmatpush2.msra.mxu0 0.0
    %1325 = vmatprep.subr.mxu0 0.0
    %1326 = vmatpush2.msra.mxu0 0.0
    %1327 = vmatprep.subr.mxu0 0.0
    %1328 = vmatpush2.msra.mxu0 0.0
    %1329 = vmatprep.subr.mxu0 0.0
    %1330 = vmatpush2.msra.mxu0 0.0
    %1331 = vmatprep.subr.mxu0 0.0
    %1332 = vmatpush2.msra.mxu0 0.0
    %1333 = vmatprep.subr.mxu0 0.0
    %1334 = vmatpush2.msra.mxu0 0.0
    %1335 = vmatprep.subr.mxu0 0.0
    %1336 = vmatpush2.msra.mxu0 0.0
    %1337 = vmatprep.subr.mxu0 0.0
    %1338 = vmatpush2.msra.mxu0 0.0
    %1339 = vmatprep.subr.mxu0 0.0
    %1340 = vmatpush2.msra.mxu0 0.0
    %1341 = vmatprep.subr.mxu0 0.0
    %1342 = vmatpush2.msra.mxu0 0.0
    %1343 = vmatprep.subr.mxu0 0.0
    %1344 = vmatpush2.msra.mxu0 0.0
    %1345 = vmatprep.subr.mxu0 0.0
    %1346 = vmatpush2.msra.mxu0 0.0
    %1347 = vmatprep.subr.mxu0 0.0
    %1348 = vmatpush2.msra.mxu0 0.0
    %1349 = vmatprep.subr.mxu0 0.0
    %1350 = vmatpush2.msra.mxu0 0.0
    %1351 = vmatprep.mubr.f32.mxu0 0.0
    %1352 = vmatmul.mubr.f32.gmra.mxu0 %v1285
    %v1353 = vpop.f32.mrf.mxu0
    %v1354 = vadd.f32 0.0, %v1353
    %v1355 = vpop.f32.mrf.mxu0
    %v1356 = vadd.f32 0.0, %v1355
    %1357 = vdwg.mxu0
    %v1358 = vadd.f32 %v1222, %v1354
    %v1359 = vadd.f32 %v1225, %v1356
    %v1360 = vxor.u32 %v1358, 2147483648
    %v1361 = vxor.u32 %v1359, 2147483648
    %v1362 = vmul.f32 %v1360, 1.442695
    %v1363 = vpow.pop %v1362
    %v1364 = vmul.f32 %v1361, 1.442695
    %v1365 = vpow.pop %v1364
    %v1366 = vadd.f32 %v1363, 1.0
    %v1367 = vadd.f32 %v1365, 1.0
    %v1368 = vrcp.pop %v1366
    %v1369 = vmul.f32 1.0, %v1368
    %v1370 = vrcp.pop %v1367
    %v1371 = vmul.f32 1.0, %v1370
    %v1372 = vtanh.pop %v1359
    %1374 = vrot.lane.b32.xlu0 %v1275, 64
    %v1375 = vpop.permute.xlu0 %1374
    %v1377 = vmul.f32 %v1369, %v1375
    %v1378 = vmul.f32 %v1369, %v1372
    %1380 = vrot.lane.b32.xlu0 %v1378, 64
    %v1381 = vpop.permute.xlu0 %1380
    %v1383 = vadd.f32 %v1377, %v1381
    %v1384 = vtanh.pop %v1383
    %v1385 = vmul.f32 %v1371, %v1384
    %1387 = vrot.lane.b32.xlu0 %v1385, 64
    %v1388 = vpop.permute.xlu0 %1387
    %v1389 = vsel %vm241, %v1388, 0
    %1391 = vmatprep.subr.mxu0 0.0
    %1392 = vmatpush1.msra.mxu0 0.0
    %1393 = vmatprep.subr.mxu0 0.0
    %1394 = vmatpush1.msra.mxu0 0.0
    %1395 = vmatprep.subr.mxu0 0.0
    %1396 = vmatpush1.msra.mxu0 0.0
    %1397 = vmatprep.subr.mxu0 0.0
    %1398 = vmatpush1.msra.mxu0 0.0
    %1399 = vmatprep.subr.mxu0 0.0
    %1400 = vmatpush1.msra.mxu0 0.0
    %1401 = vmatprep.subr.mxu0 0.0
    %1402 = vmatpush1.msra.mxu0 0.0
    %1403 = vmatprep.subr.mxu0 0.0
    %1404 = vmatpush1.msra.mxu0 0.0
    %1405 = vmatprep.subr.mxu0 0.0
    %1406 = vmatpush1.msra.mxu0 0.0
    %1407 = vmatprep.subr.mxu0 %v1048
    %1408 = vmatpush1.msra.mxu0 %v1047
    %1409 = vmatprep.subr.mxu0 %v1046
    %1410 = vmatpush1.msra.mxu0 %v1045
    %1411 = vmatprep.subr.mxu0 %v1044
    %1412 = vmatpush1.msra.mxu0 %v1043
    %1413 = vmatprep.subr.mxu0 %v1042
    %1414 = vmatpush1.msra.mxu0 %v1041
    %1415 = vmatprep.subr.mxu0 %v1040
    %1416 = vmatpush1.msra.mxu0 %v1039
    %1417 = vmatprep.subr.mxu0 %v1038
    %1418 = vmatpush1.msra.mxu0 %v1037
    %1419 = vmatprep.subr.mxu0 %v1036
    %1420 = vmatpush1.msra.mxu0 %v1035
    %1421 = vmatprep.subr.mxu0 %v1034
    %1422 = vmatpush1.msra.mxu0 %v1033
    %1423 = vmatprep.subr.mxu0 0.0
    %1424 = vmatpush2.msra.mxu0 0.0
    %1425 = vmatprep.subr.mxu0 0.0
    %1426 = vmatpush2.msra.mxu0 0.0
    %1427 = vmatprep.subr.mxu0 0.0
    %1428 = vmatpush2.msra.mxu0 0.0
    %1429 = vmatprep.subr.mxu0 0.0
    %1430 = vmatpush2.msra.mxu0 0.0
    %1431 = vmatprep.subr.mxu0 0.0
    %1432 = vmatpush2.msra.mxu0 0.0
    %1433 = vmatprep.subr.mxu0 0.0
    %1434 = vmatpush2.msra.mxu0 0.0
    %1435 = vmatprep.subr.mxu0 0.0
    %1436 = vmatpush2.msra.mxu0 0.0
    %1437 = vmatprep.subr.mxu0 0.0
    %1438 = vmatpush2.msra.mxu0 0.0
    %1439 = vmatprep.subr.mxu0 0.0
    %1440 = vmatpush2.msra.mxu0 0.0
    %1441 = vmatprep.subr.mxu0 0.0
    %1442 = vmatpush2.msra.mxu0 0.0
    %1443 = vmatprep.subr.mxu0 0.0
    %1444 = vmatpush2.msra.mxu0 0.0
    %1445 = vmatprep.subr.mxu0 0.0
    %1446 = vmatpush2.msra.mxu0 0.0
    %1447 = vmatprep.subr.mxu0 0.0
    %1448 = vmatpush2.msra.mxu0 0.0
    %1449 = vmatprep.subr.mxu0 0.0
    %1450 = vmatpush2.msra.mxu0 0.0
    %1451 = vmatprep.subr.mxu0 0.0
    %1452 = vmatpush2.msra.mxu0 0.0
    %1453 = vmatprep.subr.mxu0 0.0
    %1454 = vmatpush2.msra.mxu0 0.0
    %1455 = vmatprep.mubr.f32.mxu0 0.0
    %1456 = vmatmul.mubr.f32.gmra.mxu0 %v1389
    %v1457 = vpop.f32.mrf.mxu0
    %v1458 = vadd.f32 0.0, %v1457
    %v1459 = vpop.f32.mrf.mxu0
    %v1460 = vadd.f32 0.0, %v1459
    %1461 = vdwg.mxu0
    %v1462 = vadd.f32 %v1228, %v1458
    %v1463 = vadd.f32 %v1231, %v1460
    %v1464 = vxor.u32 %v1462, 2147483648
    %v1465 = vxor.u32 %v1463, 2147483648
    %v1466 = vmul.f32 %v1464, 1.442695
    %v1467 = vpow.pop %v1466
    %v1468 = vmul.f32 %v1465, 1.442695
    %v1469 = vpow.pop %v1468
    %v1470 = vadd.f32 %v1467, 1.0
    %v1471 = vadd.f32 %v1469, 1.0
    %v1472 = vrcp.pop %v1470
    %v1473 = vmul.f32 1.0, %v1472
    %v1474 = vrcp.pop %v1471
    %v1475 = vmul.f32 1.0, %v1474
    %v1476 = vtanh.pop %v1463
    %v1477 = vmul.f32 %v1473, %v1383
    %v1478 = vmul.f32 %v1473, %v1476
    %1480 = vrot.lane.b32.xlu0 %v1478, 64
    %v1481 = vpop.permute.xlu0 %1480
    %v1483 = vadd.f32 %v1477, %v1481
    %v1484 = vtanh.pop %v1483
    %v1485 = vmul.f32 %v1475, %v1484
    %1487 = vrot.lane.b32.xlu0 %v1485, 64
    %v1488 = vpop.permute.xlu0 %1487
    %v1489 = vsel %vm241, %v1488, 0
    %1491 = vmatprep.subr.mxu0 0.0
    %1492 = vmatpush1.msra.mxu0 0.0
    %1493 = vmatprep.subr.mxu0 0.0
    %1494 = vmatpush1.msra.mxu0 0.0
    %1495 = vmatprep.subr.mxu0 0.0
    %1496 = vmatpush1.msra.mxu0 0.0
    %1497 = vmatprep.subr.mxu0 0.0
    %1498 = vmatpush1.msra.mxu0 0.0
    %1499 = vmatprep.subr.mxu0 0.0
    %1500 = vmatpush1.msra.mxu0 0.0
    %1501 = vmatprep.subr.mxu0 0.0
    %1502 = vmatpush1.msra.mxu0 0.0
    %1503 = vmatprep.subr.mxu0 0.0
    %1504 = vmatpush1.msra.mxu0 0.0
    %1505 = vmatprep.subr.mxu0 0.0
    %1506 = vmatpush1.msra.mxu0 0.0
    %1507 = vmatprep.subr.mxu0 %v1048
    %1508 = vmatpush1.msra.mxu0 %v1047
    %1509 = vmatprep.subr.mxu0 %v1046
    %1510 = vmatpush1.msra.mxu0 %v1045
    %1511 = vmatprep.subr.mxu0 %v1044
    %1512 = vmatpush1.msra.mxu0 %v1043
    %1513 = vmatprep.subr.mxu0 %v1042
    %1514 = vmatpush1.msra.mxu0 %v1041
    %1515 = vmatprep.subr.mxu0 %v1040
    %1516 = vmatpush1.msra.mxu0 %v1039
    %1517 = vmatprep.subr.mxu0 %v1038
    %1518 = vmatpush1.msra.mxu0 %v1037
    %1519 = vmatprep.subr.mxu0 %v1036
    %1520 = vmatpush1.msra.mxu0 %v1035
    %1521 = vmatprep.subr.mxu0 %v1034
    %1522 = vmatpush1.msra.mxu0 %v1033
    %1523 = vmatprep.subr.mxu0 0.0
    %1524 = vmatpush2.msra.mxu0 0.0
    %1525 = vmatprep.subr.mxu0 0.0
    %1526 = vmatpush2.msra.mxu0 0.0
    %1527 = vmatprep.subr.mxu0 0.0
    %1528 = vmatpush2.msra.mxu0 0.0
    %1529 = vmatprep.subr.mxu0 0.0
    %1530 = vmatpush2.msra.mxu0 0.0
    %1531 = vmatprep.subr.mxu0 0.0
    %1532 = vmatpush2.msra.mxu0 0.0
    %1533 = vmatprep.subr.mxu0 0.0
    %1534 = vmatpush2.msra.mxu0 0.0
    %1535 = vmatprep.subr.mxu0 0.0
    %1536 = vmatpush2.msra.mxu0 0.0
    %1537 = vmatprep.subr.mxu0 0.0
    %1538 = vmatpush2.msra.mxu0 0.0
    %1539 = vmatprep.subr.mxu0 0.0
    %1540 = vmatpush2.msra.mxu0 0.0
    %1541 = vmatprep.subr.mxu0 0.0
    %1542 = vmatpush2.msra.mxu0 0.0
    %1543 = vmatprep.subr.mxu0 0.0
    %1544 = vmatpush2.msra.mxu0 0.0
    %1545 = vmatprep.subr.mxu0 0.0
    %1546 = vmatpush2.msra.mxu0 0.0
    %1547 = vmatprep.subr.mxu0 0.0
    %1548 = vmatpush2.msra.mxu0 0.0
    %1549 = vmatprep.subr.mxu0 0.0
    %1550 = vmatpush2.msra.mxu0 0.0
    %1551 = vmatprep.subr.mxu0 0.0
    %1552 = vmatpush2.msra.mxu0 0.0
    %1553 = vmatprep.subr.mxu0 0.0
    %1554 = vmatpush2.msra.mxu0 0.0
    %1555 = vmatprep.mubr.f32.mxu0 0.0
    %1556 = vmatmul.mubr.f32.gmra.mxu0 %v1489
    %v1557 = vpop.f32.mrf.mxu0
    %v1558 = vadd.f32 0.0, %v1557
    %v1559 = vpop.f32.mrf.mxu0
    %v1560 = vadd.f32 0.0, %v1559
    %1561 = vdwg.mxu0
    %v1562 = vadd.f32 %v1234, %v1558
    %v1563 = vadd.f32 %v1237, %v1560
    %v1564 = vxor.u32 %v1562, 2147483648
    %v1565 = vxor.u32 %v1563, 2147483648
    %v1566 = vmul.f32 %v1564, 1.442695
    %v1567 = vpow.pop %v1566
    %v1568 = vmul.f32 %v1565, 1.442695
    %v1569 = vpow.pop %v1568
    %v1570 = vadd.f32 %v1567, 1.0
    %v1571 = vadd.f32 %v1569, 1.0
    %v1572 = vrcp.pop %v1570
    %v1573 = vmul.f32 1.0, %v1572
    %v1574 = vrcp.pop %v1571
    %v1575 = vmul.f32 1.0, %v1574
    %v1576 = vtanh.pop %v1563
    %v1577 = vmul.f32 %v1573, %v1483
    %v1578 = vmul.f32 %v1573, %v1576
    %1580 = vrot.lane.b32.xlu0 %v1578, 64
    %v1581 = vpop.permute.xlu0 %1580
    %v1583 = vadd.f32 %v1577, %v1581
    %v1584 = vtanh.pop %v1583
    %v1585 = vmul.f32 %v1575, %v1584
    %1587 = vrot.lane.b32.xlu0 %v1585, 64
    %v1588 = vpop.permute.xlu0 %1587
    %v1589 = vsel %vm241, %v1588, 0
    %1591 = vmatprep.subr.mxu0 0.0
    %1592 = vmatpush1.msra.mxu0 0.0
    %1593 = vmatprep.subr.mxu0 0.0
    %1594 = vmatpush1.msra.mxu0 0.0
    %1595 = vmatprep.subr.mxu0 0.0
    %1596 = vmatpush1.msra.mxu0 0.0
    %1597 = vmatprep.subr.mxu0 0.0
    %1598 = vmatpush1.msra.mxu0 0.0
    %1599 = vmatprep.subr.mxu0 0.0
    %1600 = vmatpush1.msra.mxu0 0.0
    %1601 = vmatprep.subr.mxu0 0.0
    %1602 = vmatpush1.msra.mxu0 0.0
    %1603 = vmatprep.subr.mxu0 0.0
    %1604 = vmatpush1.msra.mxu0 0.0
    %1605 = vmatprep.subr.mxu0 0.0
    %1606 = vmatpush1.msra.mxu0 0.0
    %1607 = vmatprep.subr.mxu0 %v1048
    %1608 = vmatpush1.msra.mxu0 %v1047
    %1609 = vmatprep.subr.mxu0 %v1046
    %1610 = vmatpush1.msra.mxu0 %v1045
    %1611 = vmatprep.subr.mxu0 %v1044
    %1612 = vmatpush1.msra.mxu0 %v1043
    %1613 = vmatprep.subr.mxu0 %v1042
    %1614 = vmatpush1.msra.mxu0 %v1041
    %1615 = vmatprep.subr.mxu0 %v1040
    %1616 = vmatpush1.msra.mxu0 %v1039
    %1617 = vmatprep.subr.mxu0 %v1038
    %1618 = vmatpush1.msra.mxu0 %v1037
    %1619 = vmatprep.subr.mxu0 %v1036
    %1620 = vmatpush1.msra.mxu0 %v1035
    %1621 = vmatprep.subr.mxu0 %v1034
    %1622 = vmatpush1.msra.mxu0 %v1033
    %1623 = vmatprep.subr.mxu0 0.0
    %1624 = vmatpush2.msra.mxu0 0.0
    %1625 = vmatprep.subr.mxu0 0.0
    %1626 = vmatpush2.msra.mxu0 0.0
    %1627 = vmatprep.subr.mxu0 0.0
    %1628 = vmatpush2.msra.mxu0 0.0
    %1629 = vmatprep.subr.mxu0 0.0
    %1630 = vmatpush2.msra.mxu0 0.0
    %1631 = vmatprep.subr.mxu0 0.0
    %1632 = vmatpush2.msra.mxu0 0.0
    %1633 = vmatprep.subr.mxu0 0.0
    %1634 = vmatpush2.msra.mxu0 0.0
    %1635 = vmatprep.subr.mxu0 0.0
    %1636 = vmatpush2.msra.mxu0 0.0
    %1637 = vmatprep.subr.mxu0 0.0
    %1638 = vmatpush2.msra.mxu0 0.0
    %1639 = vmatprep.subr.mxu0 0.0
    %1640 = vmatpush2.msra.mxu0 0.0
    %1641 = vmatprep.subr.mxu0 0.0
    %1642 = vmatpush2.msra.mxu0 0.0
    %1643 = vmatprep.subr.mxu0 0.0
    %1644 = vmatpush2.msra.mxu0 0.0
    %1645 = vmatprep.subr.mxu0 0.0
    %1646 = vmatpush2.msra.mxu0 0.0
    %1647 = vmatprep.subr.mxu0 0.0
    %1648 = vmatpush2.msra.mxu0 0.0
    %1649 = vmatprep.subr.mxu0 0.0
    %1650 = vmatpush2.msra.mxu0 0.0
    %1651 = vmatprep.subr.mxu0 0.0
    %1652 = vmatpush2.msra.mxu0 0.0
    %1653 = vmatprep.subr.mxu0 0.0
    %1654 = vmatpush2.msra.mxu0 0.0
    %1655 = vmatprep.mubr.f32.mxu0 0.0
    %1656 = vmatmul.mubr.f32.gmra.mxu0 %v1589
    %v1657 = vpop.f32.mrf.mxu0
    %v1658 = vadd.f32 0.0, %v1657
    %v1659 = vpop.f32.mrf.mxu0
    %v1660 = vadd.f32 0.0, %v1659
    %1661 = vdwg.mxu0
    %v1662 = vadd.f32 %v1240, %v1658
    %v1663 = vadd.f32 %v1243, %v1660
    %v1664 = vxor.u32 %v1662, 2147483648
    %v1665 = vxor.u32 %v1663, 2147483648
    %v1666 = vmul.f32 %v1664, 1.442695
    %v1667 = vpow.pop %v1666
    %v1668 = vmul.f32 %v1665, 1.442695
    %v1669 = vpow.pop %v1668
    %v1670 = vadd.f32 %v1667, 1.0
    %v1671 = vadd.f32 %v1669, 1.0
    %v1672 = vrcp.pop %v1670
    %v1673 = vmul.f32 1.0, %v1672
    %v1674 = vrcp.pop %v1671
    %v1675 = vmul.f32 1.0, %v1674
    %v1676 = vtanh.pop %v1663
    %v1677 = vmul.f32 %v1673, %v1583
    %v1678 = vmul.f32 %v1673, %v1676
    %1680 = vrot.lane.b32.xlu0 %v1678, 64
    %v1681 = vpop.permute.xlu0 %1680
    %v1683 = vadd.f32 %v1677, %v1681
    %v1684 = vtanh.pop %v1683
    %v1685 = vmul.f32 %v1675, %v1684
    %1687 = vrot.lane.b32.xlu0 %v1685, 64
    %v1688 = vpop.permute.xlu0 %1687
    %v1689 = vsel %vm241, %v1688, 0
    %1691 = vmatprep.subr.mxu0 0.0
    %1692 = vmatpush1.msra.mxu0 0.0
    %1693 = vmatprep.subr.mxu0 0.0
    %1694 = vmatpush1.msra.mxu0 0.0
    %1695 = vmatprep.subr.mxu0 0.0
    %1696 = vmatpush1.msra.mxu0 0.0
    %1697 = vmatprep.subr.mxu0 0.0
    %1698 = vmatpush1.msra.mxu0 0.0
    %1699 = vmatprep.subr.mxu0 0.0
    %1700 = vmatpush1.msra.mxu0 0.0
    %1701 = vmatprep.subr.mxu0 0.0
    %1702 = vmatpush1.msra.mxu0 0.0
    %1703 = vmatprep.subr.mxu0 0.0
    %1704 = vmatpush1.msra.mxu0 0.0
    %1705 = vmatprep.subr.mxu0 0.0
    %1706 = vmatpush1.msra.mxu0 0.0
    %1707 = vmatprep.subr.mxu0 %v1048
    %1708 = vmatpush1.msra.mxu0 %v1047
    %1709 = vmatprep.subr.mxu0 %v1046
    %1710 = vmatpush1.msra.mxu0 %v1045
    %1711 = vmatprep.subr.mxu0 %v1044
    %1712 = vmatpush1.msra.mxu0 %v1043
    %1713 = vmatprep.subr.mxu0 %v1042
    %1714 = vmatpush1.msra.mxu0 %v1041
    %1715 = vmatprep.subr.mxu0 %v1040
    %1716 = vmatpush1.msra.mxu0 %v1039
    %1717 = vmatprep.subr.mxu0 %v1038
    %1718 = vmatpush1.msra.mxu0 %v1037
    %1719 = vmatprep.subr.mxu0 %v1036
    %1720 = vmatpush1.msra.mxu0 %v1035
    %1721 = vmatprep.subr.mxu0 %v1034
    %1722 = vmatpush1.msra.mxu0 %v1033
    %1723 = vmatprep.subr.mxu0 0.0
    %1724 = vmatpush2.msra.mxu0 0.0
    %1725 = vmatprep.subr.mxu0 0.0
    %1726 = vmatpush2.msra.mxu0 0.0
    %1727 = vmatprep.subr.mxu0 0.0
    %1728 = vmatpush2.msra.mxu0 0.0
    %1729 = vmatprep.subr.mxu0 0.0
    %1730 = vmatpush2.msra.mxu0 0.0
    %1731 = vmatprep.subr.mxu0 0.0
    %1732 = vmatpush2.msra.mxu0 0.0
    %1733 = vmatprep.subr.mxu0 0.0
    %1734 = vmatpush2.msra.mxu0 0.0
    %1735 = vmatprep.subr.mxu0 0.0
    %1736 = vmatpush2.msra.mxu0 0.0
    %1737 = vmatprep.subr.mxu0 0.0
    %1738 = vmatpush2.msra.mxu0 0.0
    %1739 = vmatprep.subr.mxu0 0.0
    %1740 = vmatpush2.msra.mxu0 0.0
    %1741 = vmatprep.subr.mxu0 0.0
    %1742 = vmatpush2.msra.mxu0 0.0
    %1743 = vmatprep.subr.mxu0 0.0
    %1744 = vmatpush2.msra.mxu0 0.0
    %1745 = vmatprep.subr.mxu0 0.0
    %1746 = vmatpush2.msra.mxu0 0.0
    %1747 = vmatprep.subr.mxu0 0.0
    %1748 = vmatpush2.msra.mxu0 0.0
    %1749 = vmatprep.subr.mxu0 0.0
    %1750 = vmatpush2.msra.mxu0 0.0
    %1751 = vmatprep.subr.mxu0 0.0
    %1752 = vmatpush2.msra.mxu0 0.0
    %1753 = vmatprep.subr.mxu0 0.0
    %1754 = vmatpush2.msra.mxu0 0.0
    %1755 = vmatprep.mubr.f32.mxu0 0.0
    %1756 = vmatmul.mubr.f32.gmra.mxu0 %v1689
    %v1757 = vpop.f32.mrf.mxu0
    %v1758 = vadd.f32 0.0, %v1757
    %v1759 = vpop.f32.mrf.mxu0
    %v1760 = vadd.f32 0.0, %v1759
    %1761 = vdwg.mxu0
    %v1762 = vadd.f32 %v1246, %v1758
    %v1763 = vadd.f32 %v1249, %v1760
    %v1764 = vxor.u32 %v1762, 2147483648
    %v1765 = vxor.u32 %v1763, 2147483648
    %v1766 = vmul.f32 %v1764, 1.442695
    %v1767 = vpow.pop %v1766
    %v1768 = vmul.f32 %v1765, 1.442695
    %v1769 = vpow.pop %v1768
    %v1770 = vadd.f32 %v1767, 1.0
    %v1771 = vadd.f32 %v1769, 1.0
    %v1772 = vrcp.pop %v1770
    %v1773 = vmul.f32 1.0, %v1772
    %v1774 = vrcp.pop %v1771
    %v1775 = vmul.f32 1.0, %v1774
    %v1776 = vtanh.pop %v1763
    %v1777 = vmul.f32 %v1773, %v1683
    %v1778 = vmul.f32 %v1773, %v1776
    %1780 = vrot.lane.b32.xlu0 %v1778, 64
    %v1781 = vpop.permute.xlu0 %1780
    %v1783 = vadd.f32 %v1777, %v1781
    %v1784 = vtanh.pop %v1783
    %v1785 = vmul.f32 %v1775, %v1784
    %1787 = vrot.lane.b32.xlu0 %v1785, 64
    %v1788 = vpop.permute.xlu0 %1787
    %v1789 = vsel %vm241, %v1788, 0
    %1791 = vmatprep.subr.mxu0 0.0
    %1792 = vmatpush1.msra.mxu0 0.0
    %1793 = vmatprep.subr.mxu0 0.0
    %1794 = vmatpush1.msra.mxu0 0.0
    %1795 = vmatprep.subr.mxu0 0.0
    %1796 = vmatpush1.msra.mxu0 0.0
    %1797 = vmatprep.subr.mxu0 0.0
    %1798 = vmatpush1.msra.mxu0 0.0
    %1799 = vmatprep.subr.mxu0 0.0
    %1800 = vmatpush1.msra.mxu0 0.0
    %1801 = vmatprep.subr.mxu0 0.0
    %1802 = vmatpush1.msra.mxu0 0.0
    %1803 = vmatprep.subr.mxu0 0.0
    %1804 = vmatpush1.msra.mxu0 0.0
    %1805 = vmatprep.subr.mxu0 0.0
    %1806 = vmatpush1.msra.mxu0 0.0
    %1807 = vmatprep.subr.mxu0 %v1048
    %1808 = vmatpush1.msra.mxu0 %v1047
    %1809 = vmatprep.subr.mxu0 %v1046
    %1810 = vmatpush1.msra.mxu0 %v1045
    %1811 = vmatprep.subr.mxu0 %v1044
    %1812 = vmatpush1.msra.mxu0 %v1043
    %1813 = vmatprep.subr.mxu0 %v1042
    %1814 = vmatpush1.msra.mxu0 %v1041
    %1815 = vmatprep.subr.mxu0 %v1040
    %1816 = vmatpush1.msra.mxu0 %v1039
    %1817 = vmatprep.subr.mxu0 %v1038
    %1818 = vmatpush1.msra.mxu0 %v1037
    %1819 = vmatprep.subr.mxu0 %v1036
    %1820 = vmatpush1.msra.mxu0 %v1035
    %1821 = vmatprep.subr.mxu0 %v1034
    %1822 = vmatpush1.msra.mxu0 %v1033
    %1823 = vmatprep.subr.mxu0 0.0
    %1824 = vmatpush2.msra.mxu0 0.0
    %1825 = vmatprep.subr.mxu0 0.0
    %1826 = vmatpush2.msra.mxu0 0.0
    %1827 = vmatprep.subr.mxu0 0.0
    %1828 = vmatpush2.msra.mxu0 0.0
    %1829 = vmatprep.subr.mxu0 0.0
    %1830 = vmatpush2.msra.mxu0 0.0
    %1831 = vmatprep.subr.mxu0 0.0
    %1832 = vmatpush2.msra.mxu0 0.0
    %1833 = vmatprep.subr.mxu0 0.0
    %1834 = vmatpush2.msra.mxu0 0.0
    %1835 = vmatprep.subr.mxu0 0.0
    %1836 = vmatpush2.msra.mxu0 0.0
    %1837 = vmatprep.subr.mxu0 0.0
    %1838 = vmatpush2.msra.mxu0 0.0
    %1839 = vmatprep.subr.mxu0 0.0
    %1840 = vmatpush2.msra.mxu0 0.0
    %1841 = vmatprep.subr.mxu0 0.0
    %1842 = vmatpush2.msra.mxu0 0.0
    %1843 = vmatprep.subr.mxu0 0.0
    %1844 = vmatpush2.msra.mxu0 0.0
    %1845 = vmatprep.subr.mxu0 0.0
    %1846 = vmatpush2.msra.mxu0 0.0
    %1847 = vmatprep.subr.mxu0 0.0
    %1848 = vmatpush2.msra.mxu0 0.0
    %1849 = vmatprep.subr.mxu0 0.0
    %1850 = vmatpush2.msra.mxu0 0.0
    %1851 = vmatprep.subr.mxu0 0.0
    %1852 = vmatpush2.msra.mxu0 0.0
    %1853 = vmatprep.subr.mxu0 0.0
    %1854 = vmatpush2.msra.mxu0 0.0
    %1855 = vmatprep.mubr.f32.mxu0 0.0
    %1856 = vmatmul.mubr.f32.gmra.mxu0 %v1789
    %v1857 = vpop.f32.mrf.mxu0
    %v1858 = vadd.f32 0.0, %v1857
    %v1859 = vpop.f32.mrf.mxu0
    %v1860 = vadd.f32 0.0, %v1859
    %1861 = vdwg.mxu0
    %v1862 = vadd.f32 %v1252, %v1858
    %v1863 = vadd.f32 %v1255, %v1860
    %v1864 = vxor.u32 %v1862, 2147483648
    %v1865 = vxor.u32 %v1863, 2147483648
    %v1866 = vmul.f32 %v1864, 1.442695
    %v1867 = vpow.pop %v1866
    %v1868 = vmul.f32 %v1865, 1.442695
    %v1869 = vpow.pop %v1868
    %v1870 = vadd.f32 %v1867, 1.0
    %v1871 = vadd.f32 %v1869, 1.0
    %v1872 = vrcp.pop %v1870
    %v1873 = vmul.f32 1.0, %v1872
    %v1874 = vrcp.pop %v1871
    %v1875 = vmul.f32 1.0, %v1874
    %v1876 = vtanh.pop %v1863
    %v1877 = vmul.f32 %v1873, %v1783
    %v1878 = vmul.f32 %v1873, %v1876
    %1880 = vrot.lane.b32.xlu0 %v1878, 64
    %v1881 = vpop.permute.xlu0 %1880
    %v1883 = vadd.f32 %v1877, %v1881
    %v1884 = vtanh.pop %v1883
    %v1885 = vmul.f32 %v1875, %v1884
    %1887 = vrot.lane.b32.xlu0 %v1885, 64
    %v1888 = vpop.permute.xlu0 %1887
    %v1889 = vsel %vm241, %v1888, 0
    %1891 = vmatprep.subr.mxu0 0.0
    %1892 = vmatpush1.msra.mxu0 0.0
    %1893 = vmatprep.subr.mxu0 0.0
    %1894 = vmatpush1.msra.mxu0 0.0
    %1895 = vmatprep.subr.mxu0 0.0
    %1896 = vmatpush1.msra.mxu0 0.0
    %1897 = vmatprep.subr.mxu0 0.0
    %1898 = vmatpush1.msra.mxu0 0.0
    %1899 = vmatprep.subr.mxu0 0.0
    %1900 = vmatpush1.msra.mxu0 0.0
    %1901 = vmatprep.subr.mxu0 0.0
    %1902 = vmatpush1.msra.mxu0 0.0
    %1903 = vmatprep.subr.mxu0 0.0
    %1904 = vmatpush1.msra.mxu0 0.0
    %1905 = vmatprep.subr.mxu0 0.0
    %1906 = vmatpush1.msra.mxu0 0.0
    %1907 = vmatprep.subr.mxu0 %v1048
    %1908 = vmatpush1.msra.mxu0 %v1047
    %1909 = vmatprep.subr.mxu0 %v1046
    %1910 = vmatpush1.msra.mxu0 %v1045
    %1911 = vmatprep.subr.mxu0 %v1044
    %1912 = vmatpush1.msra.mxu0 %v1043
    %1913 = vmatprep.subr.mxu0 %v1042
    %1914 = vmatpush1.msra.mxu0 %v1041
    %1915 = vmatprep.subr.mxu0 %v1040
    %1916 = vmatpush1.msra.mxu0 %v1039
    %1917 = vmatprep.subr.mxu0 %v1038
    %1918 = vmatpush1.msra.mxu0 %v1037
    %1919 = vmatprep.subr.mxu0 %v1036
    %1920 = vmatpush1.msra.mxu0 %v1035
    %1921 = vmatprep.subr.mxu0 %v1034
    %1922 = vmatpush1.msra.mxu0 %v1033
    %1923 = vmatprep.subr.mxu0 0.0
    %1924 = vmatpush2.msra.mxu0 0.0
    %1925 = vmatprep.subr.mxu0 0.0
    %1926 = vmatpush2.msra.mxu0 0.0
    %1927 = vmatprep.subr.mxu0 0.0
    %1928 = vmatpush2.msra.mxu0 0.0
    %1929 = vmatprep.subr.mxu0 0.0
    %1930 = vmatpush2.msra.mxu0 0.0
    %1931 = vmatprep.subr.mxu0 0.0
    %1932 = vmatpush2.msra.mxu0 0.0
    %1933 = vmatprep.subr.mxu0 0.0
    %1934 = vmatpush2.msra.mxu0 0.0
    %1935 = vmatprep.subr.mxu0 0.0
    %1936 = vmatpush2.msra.mxu0 0.0
    %1937 = vmatprep.subr.mxu0 0.0
    %1938 = vmatpush2.msra.mxu0 0.0
    %1939 = vmatprep.subr.mxu0 0.0
    %1940 = vmatpush2.msra.mxu0 0.0
    %1941 = vmatprep.subr.mxu0 0.0
    %1942 = vmatpush2.msra.mxu0 0.0
    %1943 = vmatprep.subr.mxu0 0.0
    %1944 = vmatpush2.msra.mxu0 0.0
    %1945 = vmatprep.subr.mxu0 0.0
    %1946 = vmatpush2.msra.mxu0 0.0
    %1947 = vmatprep.subr.mxu0 0.0
    %1948 = vmatpush2.msra.mxu0 0.0
    %1949 = vmatprep.subr.mxu0 0.0
    %1950 = vmatpush2.msra.mxu0 0.0
    %1951 = vmatprep.subr.mxu0 0.0
    %1952 = vmatpush2.msra.mxu0 0.0
    %1953 = vmatprep.subr.mxu0 0.0
    %1954 = vmatpush2.msra.mxu0 0.0
    %1955 = vmatprep.mubr.f32.mxu0 0.0
    %1956 = vmatmul.mubr.f32.gmra.mxu0 %v1889
    %v1957 = vpop.f32.mrf.mxu0
    %v1958 = vadd.f32 0.0, %v1957
    %v1959 = vpop.f32.mrf.mxu0
    %v1960 = vadd.f32 0.0, %v1959
    %1961 = vdwg.mxu0
    %v1962 = vadd.f32 %v1258, %v1958
    %v1963 = vadd.f32 %v1261, %v1960
    %v1964 = vxor.u32 %v1962, 2147483648
    %v1965 = vxor.u32 %v1963, 2147483648
    %v1966 = vmul.f32 %v1964, 1.442695
    %v1967 = vpow.pop %v1966
    %v1968 = vmul.f32 %v1965, 1.442695
    %v1969 = vpow.pop %v1968
    %v1970 = vadd.f32 %v1967, 1.0
    %v1971 = vadd.f32 %v1969, 1.0
    %v1972 = vrcp.pop %v1970
    %v1973 = vmul.f32 1.0, %v1972
    %v1974 = vrcp.pop %v1971
    %v1975 = vmul.f32 1.0, %v1974
    %v1976 = vtanh.pop %v1963
    %v1977 = vmul.f32 %v1973, %v1883
    %v1978 = vmul.f32 %v1973, %v1976
    %1980 = vrot.lane.b32.xlu0 %v1978, 64
    %v1981 = vpop.permute.xlu0 %1980
    %v1983 = vadd.f32 %v1977, %v1981
    %v1984 = vtanh.pop %v1983
    %v1985 = vmul.f32 %v1975, %v1984
    %1987 = vrot.lane.b32.xlu0 %v1985, 64
    %v1988 = vpop.permute.xlu0 %1987
    %v1991 = vsel %vm239, %v1988, %v1284
    %v1992 = vld [vmem:[%s7] sm:$0xff]
    %v1993 = vld [vmem:[%s7 + $0x8] sm:$0xff]
    %v1994 = vld [vmem:[%s7 + $0x10] sm:$0xff]
    %v1995 = vld [vmem:[%s7 + $0x18] sm:$0xff]
    %v1996 = vld [vmem:[%s7 + $0x20] sm:$0xff]
    %v1997 = vld [vmem:[%s7 + $0x28] sm:$0xff]
    %v1998 = vld [vmem:[%s7 + $0x30] sm:$0xff]
    %v1999 = vld [vmem:[%s7 + $0x38] sm:$0xff]
    %v2000 = vld [vmem:[%s8] sm:$0x1]
    %v2002 = vlaneseq
    %v2003 = vshrl.u32 %v2002, 7
    %v2004 = vsub.s32 0, %v2003
    %v2005 = vrot.slane %v2000, %v2004
    %v2008 = vsel %vm241, %v1991, 0
    %2010 = vmatprep.subr.mxu0 0.0
    %2011 = vmatpush1.msra.mxu0 0.0
    %2012 = vmatprep.subr.mxu0 0.0
    %2013 = vmatpush1.msra.mxu0 0.0
    %2014 = vmatprep.subr.mxu0 0.0
    %2015 = vmatpush1.msra.mxu0 0.0
    %2016 = vmatprep.subr.mxu0 0.0
    %2017 = vmatpush1.msra.mxu0 0.0
    %2018 = vmatprep.subr.mxu0 0.0
    %2019 = vmatpush1.msra.mxu0 0.0
    %2020 = vmatprep.subr.mxu0 0.0
    %2021 = vmatpush1.msra.mxu0 0.0
    %2022 = vmatprep.subr.mxu0 0.0
    %2023 = vmatpush1.msra.mxu0 0.0
    %2024 = vmatprep.subr.mxu0 0.0
    %2025 = vmatpush1.msra.mxu0 0.0
    %2026 = vmatprep.subr.mxu0 0.0
    %2027 = vmatpush1.msra.mxu0 %v1999
    %2028 = vmatprep.subr.mxu0 0.0
    %2029 = vmatpush1.msra.mxu0 %v1998
    %2030 = vmatprep.subr.mxu0 0.0
    %2031 = vmatpush1.msra.mxu0 %v1997
    %2032 = vmatprep.subr.mxu0 0.0
    %2033 = vmatpush1.msra.mxu0 %v1996
    %2034 = vmatprep.subr.mxu0 0.0
    %2035 = vmatpush1.msra.mxu0 %v1995
    %2036 = vmatprep.subr.mxu0 0.0
    %2037 = vmatpush1.msra.mxu0 %v1994
    %2038 = vmatprep.subr.mxu0 0.0
    %2039 = vmatpush1.msra.mxu0 %v1993
    %2040 = vmatprep.subr.mxu0 0.0
    %2041 = vmatpush1.msra.mxu0 %v1992
    %2042 = vmatprep.subr.mxu0 0.0
    %2043 = vmatpush2.msra.mxu0 0.0
    %2044 = vmatprep.subr.mxu0 0.0
    %2045 = vmatpush2.msra.mxu0 0.0
    %2046 = vmatprep.subr.mxu0 0.0
    %2047 = vmatpush2.msra.mxu0 0.0
    %2048 = vmatprep.subr.mxu0 0.0
    %2049 = vmatpush2.msra.mxu0 0.0
    %2050 = vmatprep.subr.mxu0 0.0
    %2051 = vmatpush2.msra.mxu0 0.0
    %2052 = vmatprep.subr.mxu0 0.0
    %2053 = vmatpush2.msra.mxu0 0.0
    %2054 = vmatprep.subr.mxu0 0.0
    %2055 = vmatpush2.msra.mxu0 0.0
    %2056 = vmatprep.subr.mxu0 0.0
    %2057 = vmatpush2.msra.mxu0 0.0
    %2058 = vmatprep.subr.mxu0 0.0
    %2059 = vmatpush2.msra.mxu0 0.0
    %2060 = vmatprep.subr.mxu0 0.0
    %2061 = vmatpush2.msra.mxu0 0.0
    %2062 = vmatprep.subr.mxu0 0.0
    %2063 = vmatpush2.msra.mxu0 0.0
    %2064 = vmatprep.subr.mxu0 0.0
    %2065 = vmatpush2.msra.mxu0 0.0
    %2066 = vmatprep.subr.mxu0 0.0
    %2067 = vmatpush2.msra.mxu0 0.0
    %2068 = vmatprep.subr.mxu0 0.0
    %2069 = vmatpush2.msra.mxu0 0.0
    %2070 = vmatprep.subr.mxu0 0.0
    %2071 = vmatpush2.msra.mxu0 0.0
    %2072 = vmatprep.subr.mxu0 0.0
    %2073 = vmatpush2.msra.mxu0 0.0
    %2074 = vmatprep.mubr.f32.mxu0 0.0
    %2075 = vmatmul.mubr.f32.gmra.mxu0 %v2008
    %v2076 = vpop.f32.mrf.mxu0
    %v2077 = vadd.f32 %v2005, %v2076
    %v2078 = vpop.f32.mrf.mxu0
    %2079 = vdwg.mxu0
    %vm2080 = vcmask 80896
    %2081 = vst.msk [vmem:[#allocation7] sm:$0xff] %vm2080, %v2077
    // Predicated region
    $region46: #{tpu_custom_call.1} parent=1 // pred_check
      _
    $region47: #{tpu_custom_call.1} parent=1 // pred_check_branch
      %2083 = sbr.rel (0) target = $region49
    $region48: #{tpu_custom_call.1} parent=1 // pred_region
      %s2085 = ssub.s32 128, 128
      %2086 = vsyncadd [#allocation4], %s2085
      %s2088 = sshll.u32 [#allocation7], 4
      %s2089 = int_to_ptr.vmem [resolvable:$true] %s2088
      %2091 = dma.vmem_to_hbm [thread:$0]  %s2089, 128, %s9, [#allocation4]
    $region49: #{tpu_custom_call.1} parent=1 // pred_fallthru
      _
    // Predicated region
    $region50: #{tpu_custom_call.1} parent=1 // pred_check
      _
    $region51: #{tpu_custom_call.1} parent=1 // pred_check_branch
      %2093 = sbr.rel (0) target = $region53
    $region52: #{tpu_custom_call.1} parent=1 // pred_region
      %2094 = dma.done [#allocation4], 128
    $region53: #{tpu_custom_call.1} parent=1 // pred_fallthru
      _
    %2095 = vsyncpa [#allocation3], 1
    %2096 = vsyncpa [#allocation6], 1
    %2097 = vsyncpa [#allocation4], 1

</llo_original>
